<compile_context>
chip_gen: v7x
topology: tpu7x:2x2x1
jax: 0.10.0
libtpu: 0.0.40
codegen_flags: <defaults>
</compile_context>

<pallas_src>
import jax
import jax.numpy as jnp
from jax.experimental import pallas as pl
from jax.experimental.pallas import tpu as pltpu


# ---------------------------------------------------------------------------
# Additive-attention Pallas kernel
# ---------------------------------------------------------------------------

def _attention_body(k_ref, q_ref, v_ref, mask_ref,
                    wk_ref, wq_ref, bq_ref, wv_ref, bv_ref, out_ref, p_ref):
    tb, s, kd = k_ref.shape
    sq = q_ref.shape[1]
    vd = v_ref.shape[-1]

    # Projections on the MXU.  q is projected at its native sequence length
    # (sq == 1 in the model path), then broadcast-added across S.
    kh = jnp.dot(k_ref[...].reshape(tb * s, kd).astype(jnp.float32),
                 wk_ref[...], preferred_element_type=jnp.float32)            # (tb*s, vd)
    qh = jnp.dot(q_ref[...].reshape(tb * sq, kd).astype(jnp.float32),
                 wq_ref[...], preferred_element_type=jnp.float32) + bq_ref[...]
    h = jax.nn.sigmoid(kh.reshape(tb, s, vd) + qh.reshape(tb, sq, vd))       # (tb, s, vd)

    # fcv(.) as VPU multiply + lane (XLU) reduction; energy keeps S on lanes.
    energy = jnp.sum(h * wv_ref[...].reshape(1, 1, vd), axis=-1) + bv_ref[...]   # (tb, s)

    if mask_ref is not None:
        energy = jnp.where(mask_ref[...].reshape(tb, s) == 0.0,
                           jnp.float32(-1e9), energy)

    # Numerically stable softmax over the sequence axis (torch dim=1).
    e_max = jnp.max(energy, axis=-1, keepdims=True)
    p = jnp.exp(energy - e_max)
    denom = jnp.sum(p, axis=-1, keepdims=True)
    p = p * pl.reciprocal(denom, approx=True)                                # EUP slot

    # Lane-dense attention-weight store: (tb, 1, S).
    p_ref[...] = p.reshape(tb, 1, s).astype(p_ref.dtype)

    # Weighted sum over the sequence axis (VPU mul + sublane reduce).
    vv = v_ref[...].astype(jnp.float32)
    ctx = jnp.sum(p[:, :, None] * vv, axis=1)                                # (tb, vd)
    out_ref[...] = ctx.reshape(tb, 1, vd).astype(out_ref.dtype)


def _make_kernel(has_mask, kv_shared):
    def kernel(*refs):
        it = iter(refs)
        k_ref = next(it)
        q_ref = next(it)
        v_ref = k_ref if kv_shared else next(it)
        mask_ref = next(it) if has_mask else None
        wk_ref, wq_ref, bq_ref, wv_ref, bv_ref, out_ref, p_ref = it
        _attention_body(k_ref, q_ref, v_ref, mask_ref,
                        wk_ref, wq_ref, bq_ref, wv_ref, bv_ref, out_ref, p_ref)
    return kernel


# ---------------------------------------------------------------------------
# Wrapper
# ---------------------------------------------------------------------------

def _pick_tb(B, S, Sq, k_dim, v_dim, kv_shared, has_mask,
             vmem_budget_bytes=24 * 1024 * 1024):
    """Largest per-step batch tile that fits a conservative (v7x-safe) VMEM
    budget while keeping >= 2 grid steps (so both TensorCores get work)."""
    def block_bytes(tb):
        elems = tb * (S * k_dim + Sq * k_dim
                      + (0 if kv_shared else S * v_dim)
                      + (S if has_mask else 0)
                      + S + v_dim)                     # k+q+v+mask+p+out (f32)
        return 2 * elems * 4                           # double-buffered
    divisors = [d for d in range(1, B + 1)
                if B % d == 0 and block_bytes(d) <= vmem_budget_bytes]
    if not divisors:
        return 1
    multi_step = [d for d in divisors if B // d >= 2]
    return max(multi_step) if multi_step else max(divisors)


def additive_attention(k, q, v, params, mask=None, *, tb=None, kv_shared=None):
    """AdditiveAttention.forward.  k: (B,S,k_dim); q: (B,Sq,k_dim) with Sq in
    {1, S}; v: (B,S,v_dim); mask: optional (B,S,1)/(B,S).
    Returns ((B,1,v_dim), (B,S,1))."""
    wk, wq, bq, wv, bv = params
    B, S, k_dim = k.shape
    Sq = q.shape[1]
    v_dim = v.shape[-1]
    if kv_shared is None:
        kv_shared = k is v
    if kv_shared:
        assert v.shape == k.shape

    wk_f = jnp.asarray(wk, jnp.float32)                               # (k_dim, v_dim)
    wq_f = jnp.asarray(wq, jnp.float32)                               # (k_dim, v_dim)
    bq_f = jnp.asarray(bq, jnp.float32).reshape(1, v_dim)
    wv_f = jnp.asarray(wv, jnp.float32).reshape(1, v_dim)
    bv_f = jnp.asarray(bv, jnp.float32).reshape(1, 1)

    has_mask = mask is not None
    if tb is None:
        tb = _pick_tb(B, S, Sq, k_dim, v_dim, kv_shared, has_mask)
    assert B % tb == 0, "batch must be divisible by the batch tile"
    grid = (B // tb,)

    in_specs = [pl.BlockSpec((tb, S, k_dim), lambda b: (b, 0, 0)),    # k
                pl.BlockSpec((tb, Sq, k_dim), lambda b: (b, 0, 0))]   # q
    operands = [k, q]
    if not kv_shared:
        in_specs.append(pl.BlockSpec((tb, S, v_dim), lambda b: (b, 0, 0)))
        operands.append(v)
    if has_mask:
        in_specs.append(pl.BlockSpec((tb, 1, S), lambda b: (b, 0, 0)))
        operands.append(mask.astype(jnp.float32).reshape(B, 1, S))    # lane-dense
    in_specs += [pl.BlockSpec((k_dim, v_dim), lambda b: (0, 0)),      # Wk
                 pl.BlockSpec((k_dim, v_dim), lambda b: (0, 0)),      # Wq
                 pl.BlockSpec((1, v_dim), lambda b: (0, 0)),          # bq
                 pl.BlockSpec((1, v_dim), lambda b: (0, 0)),          # Wv row
                 pl.BlockSpec((1, 1), lambda b: (0, 0))]              # bv
    operands += [wk_f, wq_f, bq_f, wv_f, bv_f]

    out_shape = (jax.ShapeDtypeStruct((B, 1, v_dim), k.dtype),
                 jax.ShapeDtypeStruct((B, 1, S), k.dtype))            # p_atten lane-dense
    out_specs = (pl.BlockSpec((tb, 1, v_dim), lambda b: (b, 0, 0)),
                 pl.BlockSpec((tb, 1, S), lambda b: (b, 0, 0)))

    out, p_lane = pl.pallas_call(
        _make_kernel(has_mask, kv_shared),
        out_shape=out_shape, grid=grid,
        in_specs=in_specs, out_specs=out_specs,
        compiler_params=pltpu.CompilerParams(
            dimension_semantics=("parallel",),
            vmem_limit_bytes=48 * 1024 * 1024),
    )(*operands)

    p_atten = jnp.transpose(p_lane, (0, 2, 1))                        # (B, S, 1) for callers
    return out, p_atten


# ---------------------------------------------------------------------------
# AttentiveModel forward (kernel used for the attention core)
# ---------------------------------------------------------------------------

def attentive_model_forward(inputs, emb_w, att_params, w_out, b_out,
                            pad_idx=0, use_kernel=True):
    # TODO(synk): the embedding renorm/gather, the 2D->D output linear and the
    # tied logits matmul stay in XLA; only the additive-attention core runs in
    # Pallas.
    # nn.Embedding(max_norm=1): PyTorch renorms (in place) the rows that appear
    # in `inputs` before the gather, so the tied logits matmul also sees the
    # renormed rows.  Reproduce that functionally here.
    norms = jnp.sqrt(jnp.sum(emb_w * emb_w, axis=-1, keepdims=True))
    scale = jnp.where(norms > 1.0, 1.0 / (norms + 1e-7), 1.0)
    present = jnp.zeros((emb_w.shape[0],), bool).at[inputs.reshape(-1)].set(True)
    emb_w_rn = jnp.where(present[:, None], emb_w * scale, emb_w)

    emb = jnp.take(emb_w_rn, inputs, axis=0)                          # (B, S, D)
    mask = (inputs != pad_idx)[..., None]                             # (B, S, 1)
    embedded = emb * mask.astype(emb.dtype)
    sl = embedded[:, -1:, :]                                          # (B, 1, D)
    attn = additive_attention if use_kernel else additive_attention_ref
    sg, _ = attn(embedded, sl, embedded, att_params, mask=mask)       # k is v -> shared stream
    hidden = jnp.concatenate([sl[:, 0, :], sg[:, 0, :]], axis=-1) @ w_out + b_out
    return hidden @ emb_w_rn.T                                        # (B, vocab)


# ---------------------------------------------------------------------------
# Pure-jnp reference
# ---------------------------------------------------------------------------

def additive_attention_ref(k, q, v, params, mask=None):
    wk, wq, bq, wv, bv = params
    energy = jax.nn.sigmoid(k @ wk + (q @ wq + bq)) @ wv.reshape(-1, 1) + bv  # (B,S,1)
    if mask is not None:
        energy = jnp.where(mask == 0, -1e9, energy)
    p = jax.nn.softmax(energy, axis=1)
    return jnp.sum(p * v, axis=1, keepdims=True), p


# ---------------------------------------------------------------------------
# Demo / self-check
# ---------------------------------------------------------------------------

if __name__ == "__main__":
    key = jax.random.PRNGKey(0)
    ks = jax.random.split(key, 12)

    # ---- Standalone AdditiveAttention (no-mask, k != v, full-length q) -----
    B1, S1, KD, VD = 4, 128, 32, 48
    k1 = jax.random.normal(ks[0], (B1, S1, KD), jnp.float32)
    q1 = jax.random.normal(ks[1], (B1, S1, KD), jnp.float32)
    v1 = jax.random.normal(ks[2], (B1, S1, VD), jnp.float32)
    wk1 = 0.1 * jax.random.normal(ks[3], (KD, VD), jnp.float32)   # _fck.weight.T
    wq1 = 0.1 * jax.random.normal(ks[4], (KD, VD), jnp.float32)   # _fcq.weight.T
    bq1 = 0.1 * jax.random.normal(ks[5], (VD,), jnp.float32)
    wv1 = 0.1 * jax.random.normal(ks[6], (VD,), jnp.float32)      # _fcv.weight.T
    bv1 = jnp.float32(0.05)
    p1 = (wk1, wq1, bq1, wv1, bv1)

    out_k, patt_k = additive_attention(k1, q1, v1, p1, mask=None)
    out_k = jax.block_until_ready(out_k)
    patt_k = jax.block_until_ready(patt_k)
    out_r, patt_r = additive_attention_ref(k1, q1, v1, p1, mask=None)
    assert jnp.allclose(out_k, out_r, atol=5e-3, rtol=5e-3), "attention output mismatch"
    assert jnp.allclose(patt_k, patt_r, atol=5e-3, rtol=5e-3), "p_atten mismatch"

    # ---- Full AttentiveModel forward (masked, k is v, single-step q) -------
    B, S, D, V = 8, 16, 64, 50
    inputs = jax.random.randint(ks[7], (B, S), 0, V)              # pad_idx = 0 tokens occur
    emb_w = 0.5 * jax.random.normal(ks[8], (V, D), jnp.float32)
    emb_w = emb_w.at[0].set(0.0)                                  # padding row
    wk = 0.1 * jax.random.normal(ks[9], (D, D), jnp.float32)
    wq = 0.1 * jax.random.normal(ks[10], (D, D), jnp.float32)
    sub = jax.random.split(ks[11], 4)
    bq = 0.1 * jax.random.normal(sub[0], (D,), jnp.float32)
    wv = 0.1 * jax.random.normal(sub[1], (D,), jnp.float32)
    bv = jnp.float32(-0.02)
    att_params = (wk, wq, bq, wv, bv)
    w_out = 0.1 * jax.random.normal(sub[2], (2 * D, D), jnp.float32)  # _out.weight.T
    b_out = 0.1 * jax.random.normal(sub[3], (D,), jnp.float32)

    logits_k = attentive_model_forward(inputs, emb_w, att_params, w_out, b_out,
                                       use_kernel=True)
    logits_k = jax.block_until_ready(logits_k)
    logits_r = attentive_model_forward(inputs, emb_w, att_params, w_out, b_out,
                                       use_kernel=False)
    assert jnp.allclose(logits_k, logits_r, atol=2e-2, rtol=2e-2), "model logits mismatch"

    print("KERNEL_OK")
</pallas_src>

<mosaic_0001>
module attributes {stable_mosaic.version = 11 : i64} {
  func.func @kernel(%arg0: i32, %arg1: memref<2x128x32xf32, #tpu.memory_space<vmem>>, %arg2: memref<2x128x32xf32, #tpu.memory_space<vmem>>, %arg3: memref<2x128x48xf32, #tpu.memory_space<vmem>>, %arg4: memref<32x48xf32, #tpu.memory_space<vmem>>, %arg5: memref<32x48xf32, #tpu.memory_space<vmem>>, %arg6: memref<1x48xf32, #tpu.memory_space<vmem>>, %arg7: memref<1x48xf32, #tpu.memory_space<vmem>>, %arg8: memref<1x1xf32, #tpu.memory_space<vmem>>, %arg9: memref<2x1x48xf32, #tpu.memory_space<vmem>>, %arg10: memref<2x1x128xf32, #tpu.memory_space<vmem>>) attributes {dimension_semantics = [#tpu.dimension_semantics<parallel>], iteration_bounds = array<i64: 2>, scalar_prefetch = 0 : i64, scratch_operands = 0 : i64, tpu.core_type = #tpu.core_type<tc>, window_params = [{transform_indices = @transform_0, window_bounds = array<i64: 2, 128, 32>}, {transform_indices = @transform_1, window_bounds = array<i64: 2, 128, 32>}, {transform_indices = @transform_2, window_bounds = array<i64: 2, 128, 48>}, {pipeline_mode = #tpu.pipeline_mode<synchronous>, transform_indices = @transform_3, window_bounds = array<i64: 32, 48>}, {pipeline_mode = #tpu.pipeline_mode<synchronous>, transform_indices = @transform_4, window_bounds = array<i64: 32, 48>}, {pipeline_mode = #tpu.pipeline_mode<synchronous>, transform_indices = @transform_5, window_bounds = array<i64: 1, 48>}, {pipeline_mode = #tpu.pipeline_mode<synchronous>, transform_indices = @transform_6, window_bounds = array<i64: 1, 48>}, {pipeline_mode = #tpu.pipeline_mode<synchronous>, transform_indices = @transform_7, window_bounds = array<i64: 1, 1>}, {transform_indices = @transform_8, window_bounds = array<i64: 2, 1, 48>}, {transform_indices = @transform_9, window_bounds = array<i64: 2, 1, 128>}]} {
    %c0 = arith.constant 0 : index
    %c0_0 = arith.constant 0 : index
    %c0_1 = arith.constant 0 : index
    %0 = vector.load %arg1[%c0, %c0_0, %c0_1] : memref<2x128x32xf32, #tpu.memory_space<vmem>>, vector<2x128x32xf32>
    %1 = vector.shape_cast %0 : vector<2x128x32xf32> to vector<256x32xf32>
    %c0_2 = arith.constant 0 : index
    %c0_3 = arith.constant 0 : index
    %2 = vector.load %arg4[%c0_2, %c0_3] : memref<32x48xf32, #tpu.memory_space<vmem>>, vector<32x48xf32>
    %cst = arith.constant dense<0.000000e+00> : vector<256x48xf32>
    %3 = tpu.matmul %1, %2, %cst {dimension_numbers = #tpu.dot_dimension_numbers<[1], [0], [0], [1], [0, 0, 1, 1], [], []>} : vector<256x32xf32>, vector<32x48xf32>, vector<256x48xf32> -> vector<256x48xf32>
    %c0_4 = arith.constant 0 : index
    %c0_5 = arith.constant 0 : index
    %c0_6 = arith.constant 0 : index
    %4 = vector.load %arg2[%c0_4, %c0_5, %c0_6] : memref<2x128x32xf32, #tpu.memory_space<vmem>>, vector<2x128x32xf32>
    %5 = vector.shape_cast %4 : vector<2x128x32xf32> to vector<256x32xf32>
    %c0_7 = arith.constant 0 : index
    %c0_8 = arith.constant 0 : index
    %6 = vector.load %arg5[%c0_7, %c0_8] : memref<32x48xf32, #tpu.memory_space<vmem>>, vector<32x48xf32>
    %cst_9 = arith.constant dense<0.000000e+00> : vector<256x48xf32>
    %7 = tpu.matmul %5, %6, %cst_9 {dimension_numbers = #tpu.dot_dimension_numbers<[1], [0], [0], [1], [0, 0, 1, 1], [], []>} : vector<256x32xf32>, vector<32x48xf32>, vector<256x48xf32> -> vector<256x48xf32>
    %c0_10 = arith.constant 0 : index
    %c0_11 = arith.constant 0 : index
    %8 = vector.load %arg6[%c0_10, %c0_11] : memref<1x48xf32, #tpu.memory_space<vmem>>, vector<1x48xf32>
    %9 = vector.broadcast %8 : vector<1x48xf32> to vector<256x48xf32>
    %10 = arith.addf %7, %9 : vector<256x48xf32>
    %11 = vector.shape_cast %3 : vector<256x48xf32> to vector<2x128x48xf32>
    %12 = vector.shape_cast %10 : vector<256x48xf32> to vector<2x128x48xf32>
    %13 = arith.addf %11, %12 : vector<2x128x48xf32>
    %14 = arith.negf %13 : vector<2x128x48xf32>
    %15 = math.exp %14 : vector<2x128x48xf32>
    %cst_12 = arith.constant 1.000000e+00 : f32
    %16 = vector.broadcast %cst_12 : f32 to vector<2x128x48xf32>
    %17 = arith.addf %16, %15 : vector<2x128x48xf32>
    %18 = arith.divf %16, %17 : vector<2x128x48xf32>
    %c0_13 = arith.constant 0 : index
    %c0_14 = arith.constant 0 : index
    %19 = vector.load %arg7[%c0_13, %c0_14] : memref<1x48xf32, #tpu.memory_space<vmem>>, vector<1x48xf32>
    %20 = vector.shape_cast %19 : vector<1x48xf32> to vector<1x1x48xf32>
    %21 = vector.broadcast %20 : vector<1x1x48xf32> to vector<2x128x48xf32>
    %22 = arith.mulf %18, %21 : vector<2x128x48xf32>
    %cst_15 = arith.constant dense<0.000000e+00> : vector<2x128xf32>
    %23 = vector.multi_reduction <add>, %22, %cst_15 [2] : vector<2x128x48xf32> to vector<2x128xf32>
    %c0_16 = arith.constant 0 : index
    %c0_17 = arith.constant 0 : index
    %24 = vector.load %arg8[%c0_16, %c0_17] : memref<1x1xf32, #tpu.memory_space<vmem>>, vector<1x1xf32>
    %25 = vector.broadcast %24 : vector<1x1xf32> to vector<2x128xf32>
    %26 = arith.addf %23, %25 : vector<2x128xf32>
    %cst_18 = arith.constant dense<0xFF800000> : vector<2xf32>
    %27 = vector.multi_reduction <maximumf>, %26, %cst_18 [1] : vector<2x128xf32> to vector<2xf32>
    %28 = vector.shape_cast %27 : vector<2xf32> to vector<2x1xf32>
    %29 = vector.broadcast %28 : vector<2x1xf32> to vector<2x128xf32>
    %30 = arith.subf %26, %29 : vector<2x128xf32>
    %31 = math.exp %30 : vector<2x128xf32>
    %cst_19 = arith.constant dense<0.000000e+00> : vector<2xf32>
    %32 = vector.multi_reduction <add>, %31, %cst_19 [1] : vector<2x128xf32> to vector<2xf32>
    %33 = vector.shape_cast %32 : vector<2xf32> to vector<2x1xf32>
    %34 = tpu.reciprocal %33 {approx = true} : vector<2x1xf32> -> vector<2x1xf32>
    %35 = vector.broadcast %34 : vector<2x1xf32> to vector<2x128xf32>
    %36 = arith.mulf %31, %35 : vector<2x128xf32>
    %37 = vector.shape_cast %36 : vector<2x128xf32> to vector<2x1x128xf32>
    %c0_20 = arith.constant 0 : index
    %c0_21 = arith.constant 0 : index
    %c0_22 = arith.constant 0 : index
    %38 = vector.load %arg10[%c0_20, %c0_21, %c0_22] : memref<2x1x128xf32, #tpu.memory_space<vmem>>, vector<2x1x128xf32>
    tpu.vector_store %arg10[%c0_20, %c0_21, %c0_22], %37 {strides = array<i32>} : memref<2x1x128xf32, #tpu.memory_space<vmem>>, vector<2x1x128xf32>,
    %c0_23 = arith.constant 0 : index
    %c0_24 = arith.constant 0 : index
    %c0_25 = arith.constant 0 : index
    %39 = vector.load %arg3[%c0_23, %c0_24, %c0_25] : memref<2x128x48xf32, #tpu.memory_space<vmem>>, vector<2x128x48xf32>
    %40 = vector.shape_cast %36 : vector<2x128xf32> to vector<2x128x1xf32>
    %41 = vector.broadcast %40 : vector<2x128x1xf32> to vector<2x128x48xf32>
    %42 = arith.mulf %41, %39 : vector<2x128x48xf32>
    %cst_26 = arith.constant dense<0.000000e+00> : vector<2x48xf32>
    %43 = vector.multi_reduction <add>, %42, %cst_26 [1] : vector<2x128x48xf32> to vector<2x48xf32>
    %44 = vector.shape_cast %43 : vector<2x48xf32> to vector<2x1x48xf32>
    %c0_27 = arith.constant 0 : index
    %c0_28 = arith.constant 0 : index
    %c0_29 = arith.constant 0 : index
    %45 = vector.load %arg9[%c0_27, %c0_28, %c0_29] : memref<2x1x48xf32, #tpu.memory_space<vmem>>, vector<2x1x48xf32>
    tpu.vector_store %arg9[%c0_27, %c0_28, %c0_29], %44 {strides = array<i32>} : memref<2x1x48xf32, #tpu.memory_space<vmem>>, vector<2x1x48xf32>,
    return
  }
  func.func @transform_0(%arg0: i32) -> (i32, i32, i32) {
    %c0_i32 = arith.constant 0 : i32
    %c0_i32_0 = arith.constant 0 : i32
    %c0_i32_1 = arith.constant 0 : i32
    return %arg0, %c0_i32, %c0_i32_0 : i32, i32, i32
  }
  func.func @transform_1(%arg0: i32) -> (i32, i32, i32) {
    %c0_i32 = arith.constant 0 : i32
    %c0_i32_0 = arith.constant 0 : i32
    %c0_i32_1 = arith.constant 0 : i32
    return %arg0, %c0_i32, %c0_i32_0 : i32, i32, i32
  }
  func.func @transform_2(%arg0: i32) -> (i32, i32, i32) {
    %c0_i32 = arith.constant 0 : i32
    %c0_i32_0 = arith.constant 0 : i32
    %c0_i32_1 = arith.constant 0 : i32
    return %arg0, %c0_i32, %c0_i32_0 : i32, i32, i32
  }
  func.func @transform_3(%arg0: i32) -> (i32, i32) {
    %c0_i32 = arith.constant 0 : i32
    %c0_i32_0 = arith.constant 0 : i32
    %c0_i32_1 = arith.constant 0 : i32
    return %c0_i32, %c0_i32_0 : i32, i32
  }
  func.func @transform_4(%arg0: i32) -> (i32, i32) {
    %c0_i32 = arith.constant 0 : i32
    %c0_i32_0 = arith.constant 0 : i32
    %c0_i32_1 = arith.constant 0 : i32
    return %c0_i32, %c0_i32_0 : i32, i32
  }
  func.func @transform_5(%arg0: i32) -> (i32, i32) {
    %c0_i32 = arith.constant 0 : i32
    %c0_i32_0 = arith.constant 0 : i32
    %c0_i32_1 = arith.constant 0 : i32
    return %c0_i32, %c0_i32_0 : i32, i32
  }
  func.func @transform_6(%arg0: i32) -> (i32, i32) {
    %c0_i32 = arith.constant 0 : i32
    %c0_i32_0 = arith.constant 0 : i32
    %c0_i32_1 = arith.constant 0 : i32
    return %c0_i32, %c0_i32_0 : i32, i32
  }
  func.func @transform_7(%arg0: i32) -> (i32, i32) {
    %c0_i32 = arith.constant 0 : i32
    %c0_i32_0 = arith.constant 0 : i32
    %c0_i32_1 = arith.constant 0 : i32
    return %c0_i32, %c0_i32_0 : i32, i32
  }
  func.func @transform_8(%arg0: i32) -> (i32, i32, i32) {
    %c0_i32 = arith.constant 0 : i32
    %c0_i32_0 = arith.constant 0 : i32
    %c0_i32_1 = arith.constant 0 : i32
    return %arg0, %c0_i32, %c0_i32_0 : i32, i32, i32
  }
  func.func @transform_9(%arg0: i32) -> (i32, i32, i32) {
    %c0_i32 = arith.constant 0 : i32
    %c0_i32_0 = arith.constant 0 : i32
    %c0_i32_1 = arith.constant 0 : i32
    return %arg0, %c0_i32, %c0_i32_0 : i32, i32, i32
  }
}

</mosaic_0001>

<llo_original>
// kernel: tpu_custom_call.1
$region0: #{tpu_custom_call.1}
  #allocation0 [shape = 'u32[]', space=smem, size = 0x4, offset = 0x4, fixed_abs, tag = 'smem constant byte address 0x4 - core index']
  #allocation1 [shape = 'u32[144,128]{1,0:T(1,128)}', space=vmem, size = 0x12000, scoped, tag = 'internal scratch']
  #allocation2 [shape = 'f32[1,1]{1,0:T(1,128)S(1)}', space=vmem, size = 0x200, scoped, tag = 'scoped memory for tpu_custom_call.1']
  %s0 = inlined_call_operand.vmem [shape: f32[4,128,32], index: 0, kind: input, shape index: {}]
  %s1 = inlined_call_operand.vmem [shape: f32[4,128,32], index: 1, kind: input, shape index: {}]
  %s2 = inlined_call_operand.vmem [shape: f32[4,128,48], index: 2, kind: input, shape index: {}]
  %s3 = inlined_call_operand.vmem [shape: f32[32,48], index: 3, kind: input, shape index: {}]
  %s4 = inlined_call_operand.vmem [shape: f32[32,48], index: 4, kind: input, shape index: {}]
  %s5 = inlined_call_operand.vmem [shape: f32[1,48], index: 5, kind: input, shape index: {}]
  %s6 = inlined_call_operand.vmem [shape: f32[1,48], index: 6, kind: input, shape index: {}]
  %s7 = inlined_call_operand.<no memory space> [shape: f32[1,1], index: 7, kind: input, shape index: {}]
  %s8 = inlined_call_operand.hbm [shape: f32[4,1,48], index: 8, kind: output, shape index: {0}]
  %s9 = inlined_call_operand.hbm [shape: f32[4,1,128], index: 9, kind: output, shape index: {1}]
  %10 = xla_tuple %s8, %s9
  %s11 = sld [smem:[#allocation0]]
  $region73: #{tpu_custom_call.1} parent=0
    _
  %s13 = ssub.s32 1, %s11
  %s14 = scalar_select 0, %s13, %s11
  %v15 = vstv %s7
  %16 = vst [vmem:[#allocation2] sm:$0x1] %v15
  $region1: #{tpu_custom_call.1} parent=0
    #allocation3 [shape = 'u8[2048]{0}', space=vmem, size = 0x800, scoped, tag = 'output window, operand 0']
    #allocation4 [shape = 's32[2]{0}', space=sflag, size = 0x8, scoped, tag = 'scoped memory for tpu_custom_call.1']
    #allocation5 [shape = 'u8[2048]{0}', space=vmem, size = 0x800, scoped, tag = 'output window, operand 1']
    #allocation6 [shape = 's32[2]{0}', space=sflag, size = 0x8, scoped, tag = 'scoped memory for tpu_custom_call.1']
    %17 = vsyncpa [#allocation4], 0
    %s18 = scalar_lea.sflag [#allocation4], 1
    %19 = vsyncpa %s18, 0
    %20 = vsyncpa [#allocation6], 0
    %s21 = scalar_lea.sflag [#allocation6], 1
    %22 = vsyncpa %s21, 0
    loop: start=0, step=1, limit=4
    $region2: #{tpu_custom_call.1} parent=1 // loop_pre_header
      _
    $region3: #{tpu_custom_call.1} parent=1 // loop_header
      %s24 = sphi 0, %s28
      %p25 = scmp.ge.s32.totalorder %s24, 4
      %s34 = sphi 0, %s36
      %s37 = sphi 0, %s34
      %s38 = sphi 0, %s37
      %s54 = sphi 0, %s38
      %s60 = sphi 0, %s62
      %s63 = sphi 0, %s60
      %s64 = sphi 0, %s63
      %s80 = sphi 0, %s64
      %s86 = sphi 0, %s88
      %s89 = sphi 0, %s86
      %s90 = sphi 0, %s89
      %s106 = sphi 0, %s90
      %s110 = sphi 0, %s110
      %s112 = sphi 0, %s110
      %s113 = sphi 0, %s112
      %s127 = sphi 0, %s113
      %s131 = sphi 0, %s131
      %s133 = sphi 0, %s131
      %s134 = sphi 0, %s133
      %s148 = sphi 0, %s134
      %s152 = sphi 0, %s152
      %s154 = sphi 0, %s152
      %s155 = sphi 0, %s154
      %s169 = sphi 0, %s155
      %s173 = sphi 0, %s173
      %s175 = sphi 0, %s173
      %s176 = sphi 0, %s175
      %s190 = sphi 0, %s176
      %s194 = sphi 0, %s194
      %s196 = sphi 0, %s194
      %s197 = sphi 0, %s196
      %s211 = sphi 0, %s197
      %s217 = sphi 0, %s219
      %s220 = sphi 0, %s217
      %s221 = sphi 0, %s220
      %s237 = sphi 0, %s221
      %s243 = sphi 0, %s245
      %s246 = sphi 0, %s243
      %s247 = sphi 0, %s246
      %s263 = sphi 0, %s247
    $region4: #{tpu_custom_call.1} parent=1 // loop_header_branch
      %27 = sbr.rel (%p25) target = $region8
    $region5: #{tpu_custom_call.1} parent=1 // loop_body
      %s29 = ssub.s32 %s24, 1
      %s30 = ssub.s32 %s24, 2
      %s31 = sadd.s32 %s24, 1
      %s32 = ssub.s32 %s24, %s31
      %p33 = scmp.eq.s32.totalorder %s32, 0
      %s35 = sadd.s32 %s34, 1
      %s36 = scalar_select %p33, %s34, %s35
      %p39 = pneg %p33
      %p40 = scmp.eq.s32.totalorder %s24, 1
      %p41 = por %p39, %p40
      %p42 = scmp.ne.s32.totalorder %s34, %s37
      %p43 = scmp.eq.s32.totalorder %s24, 0
      %p44 = por %p42, %p43
      %p45 = scmp.ne.s32.totalorder %s34, %s37
      %p46 = scmp.eq.s32.totalorder %s29, 1
      %p47 = por %p45, %p46
      %p48 = scmp.ne.s32.totalorder %s37, %s38
      %p49 = scmp.eq.s32.totalorder %s29, 0
      %p50 = por %p48, %p49
      %p51 = scmp.ne.s32.totalorder %s37, %s38
      %p52 = scmp.eq.s32.totalorder %s30, 1
      %p53 = por %p51, %p52
      %p55 = scmp.ne.s32.totalorder %s38, %s54
      %p56 = scmp.eq.s32.totalorder %s30, 0
      %p57 = por %p55, %p56
      %s58 = ssub.s32 %s24, %s31
      %p59 = scmp.eq.s32.totalorder %s58, 0
      %s61 = sadd.s32 %s60, 1
      %s62 = scalar_select %p59, %s60, %s61
      %p65 = pneg %p59
      %p66 = scmp.eq.s32.totalorder %s24, 1
      %p67 = por %p65, %p66
      %p68 = scmp.ne.s32.totalorder %s60, %s63
      %p69 = scmp.eq.s32.totalorder %s24, 0
      %p70 = por %p68, %p69
      %p71 = scmp.ne.s32.totalorder %s60, %s63
      %p72 = scmp.eq.s32.totalorder %s29, 1
      %p73 = por %p71, %p72
      %p74 = scmp.ne.s32.totalorder %s63, %s64
      %p75 = scmp.eq.s32.totalorder %s29, 0
      %p76 = por %p74, %p75
      %p77 = scmp.ne.s32.totalorder %s63, %s64
      %p78 = scmp.eq.s32.totalorder %s30, 1
      %p79 = por %p77, %p78
      %p81 = scmp.ne.s32.totalorder %s64, %s80
      %p82 = scmp.eq.s32.totalorder %s30, 0
      %p83 = por %p81, %p82
      %s84 = ssub.s32 %s24, %s31
      %p85 = scmp.eq.s32.totalorder %s84, 0
      %s87 = sadd.s32 %s86, 1
      %s88 = scalar_select %p85, %s86, %s87
      %p91 = pneg %p85
      %p92 = scmp.eq.s32.totalorder %s24, 1
      %p93 = por %p91, %p92
      %p94 = scmp.ne.s32.totalorder %s86, %s89
      %p95 = scmp.eq.s32.totalorder %s24, 0
      %p96 = por %p94, %p95
      %p97 = scmp.ne.s32.totalorder %s86, %s89
      %p98 = scmp.eq.s32.totalorder %s29, 1
      %p99 = por %p97, %p98
      %p100 = scmp.ne.s32.totalorder %s89, %s90
      %p101 = scmp.eq.s32.totalorder %s29, 0
      %p102 = por %p100, %p101
      %p103 = scmp.ne.s32.totalorder %s89, %s90
      %p104 = scmp.eq.s32.totalorder %s30, 1
      %p105 = por %p103, %p104
      %p107 = scmp.ne.s32.totalorder %s90, %s106
      %p108 = scmp.eq.s32.totalorder %s30, 0
      %p109 = por %p107, %p108
      %s111 = sadd.s32 %s110, 1
      %p114 = scmp.eq.s32.totalorder %s24, 1
      %p115 = scmp.ne.s32.totalorder %s110, %s112
      %p116 = scmp.eq.s32.totalorder %s24, 0
      %p117 = por %p115, %p116
      %p118 = scmp.ne.s32.totalorder %s110, %s112
      %p119 = scmp.eq.s32.totalorder %s29, 1
      %p120 = por %p118, %p119
      %p121 = scmp.ne.s32.totalorder %s112, %s113
      %p122 = scmp.eq.s32.totalorder %s29, 0
      %p123 = por %p121, %p122
      %p124 = scmp.ne.s32.totalorder %s112, %s113
      %p125 = scmp.eq.s32.totalorder %s30, 1
      %p126 = por %p124, %p125
      %p128 = scmp.ne.s32.totalorder %s113, %s127
      %p129 = scmp.eq.s32.totalorder %s30, 0
      %p130 = por %p128, %p129
      %s132 = sadd.s32 %s131, 1
      %p135 = scmp.eq.s32.totalorder %s24, 1
      %p136 = scmp.ne.s32.totalorder %s131, %s133
      %p137 = scmp.eq.s32.totalorder %s24, 0
      %p138 = por %p136, %p137
      %p139 = scmp.ne.s32.totalorder %s131, %s133
      %p140 = scmp.eq.s32.totalorder %s29, 1
      %p141 = por %p139, %p140
      %p142 = scmp.ne.s32.totalorder %s133, %s134
      %p143 = scmp.eq.s32.totalorder %s29, 0
      %p144 = por %p142, %p143
      %p145 = scmp.ne.s32.totalorder %s133, %s134
      %p146 = scmp.eq.s32.totalorder %s30, 1
      %p147 = por %p145, %p146
      %p149 = scmp.ne.s32.totalorder %s134, %s148
      %p150 = scmp.eq.s32.totalorder %s30, 0
      %p151 = por %p149, %p150
      %s153 = sadd.s32 %s152, 1
      %p156 = scmp.eq.s32.totalorder %s24, 1
      %p157 = scmp.ne.s32.totalorder %s152, %s154
      %p158 = scmp.eq.s32.totalorder %s24, 0
      %p159 = por %p157, %p158
      %p160 = scmp.ne.s32.totalorder %s152, %s154
      %p161 = scmp.eq.s32.totalorder %s29, 1
      %p162 = por %p160, %p161
      %p163 = scmp.ne.s32.totalorder %s154, %s155
      %p164 = scmp.eq.s32.totalorder %s29, 0
      %p165 = por %p163, %p164
      %p166 = scmp.ne.s32.totalorder %s154, %s155
      %p167 = scmp.eq.s32.totalorder %s30, 1
      %p168 = por %p166, %p167
      %p170 = scmp.ne.s32.totalorder %s155, %s169
      %p171 = scmp.eq.s32.totalorder %s30, 0
      %p172 = por %p170, %p171
      %s174 = sadd.s32 %s173, 1
      %p177 = scmp.eq.s32.totalorder %s24, 1
      %p178 = scmp.ne.s32.totalorder %s173, %s175
      %p179 = scmp.eq.s32.totalorder %s24, 0
      %p180 = por %p178, %p179
      %p181 = scmp.ne.s32.totalorder %s173, %s175
      %p182 = scmp.eq.s32.totalorder %s29, 1
      %p183 = por %p181, %p182
      %p184 = scmp.ne.s32.totalorder %s175, %s176
      %p185 = scmp.eq.s32.totalorder %s29, 0
      %p186 = por %p184, %p185
      %p187 = scmp.ne.s32.totalorder %s175, %s176
      %p188 = scmp.eq.s32.totalorder %s30, 1
      %p189 = por %p187, %p188
      %p191 = scmp.ne.s32.totalorder %s176, %s190
      %p192 = scmp.eq.s32.totalorder %s30, 0
      %p193 = por %p191, %p192
      %s195 = sadd.s32 %s194, 1
      %p198 = scmp.eq.s32.totalorder %s24, 1
      %p199 = scmp.ne.s32.totalorder %s194, %s196
      %p200 = scmp.eq.s32.totalorder %s24, 0
      %p201 = por %p199, %p200
      %p202 = scmp.ne.s32.totalorder %s194, %s196
      %p203 = scmp.eq.s32.totalorder %s29, 1
      %p204 = por %p202, %p203
      %p205 = scmp.ne.s32.totalorder %s196, %s197
      %p206 = scmp.eq.s32.totalorder %s29, 0
      %p207 = por %p205, %p206
      %p208 = scmp.ne.s32.totalorder %s196, %s197
      %p209 = scmp.eq.s32.totalorder %s30, 1
      %p210 = por %p208, %p209
      %p212 = scmp.ne.s32.totalorder %s197, %s211
      %p213 = scmp.eq.s32.totalorder %s30, 0
      %p214 = por %p212, %p213
      %s215 = ssub.s32 %s24, %s31
      %p216 = scmp.eq.s32.totalorder %s215, 0
      %s218 = sadd.s32 %s217, 1
      %s219 = scalar_select %p216, %s217, %s218
      %p222 = pneg %p216
      %p223 = scmp.eq.s32.totalorder %s24, 1
      %p224 = por %p222, %p223
      %p225 = scmp.ne.s32.totalorder %s217, %s220
      %p226 = scmp.eq.s32.totalorder %s24, 0
      %p227 = por %p225, %p226
      %p228 = scmp.ne.s32.totalorder %s217, %s220
      %p229 = scmp.eq.s32.totalorder %s29, 1
      %p230 = por %p228, %p229
      %p231 = scmp.ne.s32.totalorder %s220, %s221
      %p232 = scmp.eq.s32.totalorder %s29, 0
      %p233 = por %p231, %p232
      %p234 = scmp.ne.s32.totalorder %s220, %s221
      %p235 = scmp.eq.s32.totalorder %s30, 1
      %p236 = por %p234, %p235
      %p238 = scmp.ne.s32.totalorder %s221, %s237
      %p239 = scmp.eq.s32.totalorder %s30, 0
      %p240 = por %p238, %p239
      %s241 = ssub.s32 %s24, %s31
      %p242 = scmp.eq.s32.totalorder %s241, 0
      %s244 = sadd.s32 %s243, 1
      %s245 = scalar_select %p242, %s243, %s244
      %p248 = pneg %p242
      %p249 = scmp.eq.s32.totalorder %s24, 1
      %p250 = por %p248, %p249
      %p251 = scmp.ne.s32.totalorder %s243, %s246
      %p252 = scmp.eq.s32.totalorder %s24, 0
      %p253 = por %p251, %p252
      %p254 = scmp.ne.s32.totalorder %s243, %s246
      %p255 = scmp.eq.s32.totalorder %s29, 1
      %p256 = por %p254, %p255
      %p257 = scmp.ne.s32.totalorder %s246, %s247
      %p258 = scmp.eq.s32.totalorder %s29, 0
      %p259 = por %p257, %p258
      %p260 = scmp.ne.s32.totalorder %s246, %s247
      %p261 = scmp.eq.s32.totalorder %s30, 1
      %p262 = por %p260, %p261
      %p264 = scmp.ne.s32.totalorder %s247, %s263
      %p265 = scmp.eq.s32.totalorder %s30, 0
      %p266 = por %p264, %p265
      %p267 = scmp.le.s32.totalorder 1, %s24
      %p268 = scmp.lt.s32.totalorder %s24, 3
      %p269 = pnand %p267, %p268
      %p270 = pneg %p269
      // Predicated region
      $region9: #{tpu_custom_call.1} parent=5 // pred_check
        _
      $region10: #{tpu_custom_call.1} parent=5 // pred_check_branch
        %272 = sbr.rel (%p269) target = $region12
      $region11: #{tpu_custom_call.1} parent=5 // pred_region
        %s273 = ssub.s32 %s24, 1
        // Predicated region
        $region13: #{tpu_custom_call.1} parent=11 // pred_check
          %p274 = pneg %p123
        $region14: #{tpu_custom_call.1} parent=11 // pred_check_branch
          %276 = sbr.rel (%p274) target = $region16
        $region15: #{tpu_custom_call.1} parent=11 // pred_region
          _
        $region16: #{tpu_custom_call.1} parent=11 // pred_fallthru
          _
        // Predicated region
        $region17: #{tpu_custom_call.1} parent=11 // pred_check
          %p277 = pneg %p144
        $region18: #{tpu_custom_call.1} parent=11 // pred_check_branch
          %279 = sbr.rel (%p277) target = $region20
        $region19: #{tpu_custom_call.1} parent=11 // pred_region
          _
        $region20: #{tpu_custom_call.1} parent=11 // pred_fallthru
          _
        // Predicated region
        $region21: #{tpu_custom_call.1} parent=11 // pred_check
          %p280 = pneg %p165
        $region22: #{tpu_custom_call.1} parent=11 // pred_check_branch
          %282 = sbr.rel (%p280) target = $region24
        $region23: #{tpu_custom_call.1} parent=11 // pred_region
          _
        $region24: #{tpu_custom_call.1} parent=11 // pred_fallthru
          _
        // Predicated region
        $region25: #{tpu_custom_call.1} parent=11 // pred_check
          %p283 = pneg %p186
        $region26: #{tpu_custom_call.1} parent=11 // pred_check_branch
          %285 = sbr.rel (%p283) target = $region28
        $region27: #{tpu_custom_call.1} parent=11 // pred_region
          _
        $region28: #{tpu_custom_call.1} parent=11 // pred_fallthru
          _
        // Predicated region
        $region29: #{tpu_custom_call.1} parent=11 // pred_check
          %p286 = pneg %p207
        $region30: #{tpu_custom_call.1} parent=11 // pred_check_branch
          %288 = sbr.rel (%p286) target = $region32
        $region31: #{tpu_custom_call.1} parent=11 // pred_region
          _
        $region32: #{tpu_custom_call.1} parent=11 // pred_fallthru
          _
      $region12: #{tpu_custom_call.1} parent=5 // pred_fallthru
        _
      %p289 = scmp.lt.s32.totalorder %s24, 2
      // Predicated region
      $region33: #{tpu_custom_call.1} parent=5 // pred_check
        %p290 = pneg %p289
      $region34: #{tpu_custom_call.1} parent=5 // pred_check_branch
        %292 = sbr.rel (%p290) target = $region36
      $region35: #{tpu_custom_call.1} parent=5 // pred_region
        // Predicated region
        $region37: #{tpu_custom_call.1} parent=35 // pred_check
          %p293 = pneg %p44
        $region38: #{tpu_custom_call.1} parent=35 // pred_check_branch
          %295 = sbr.rel (%p293) target = $region40
        $region39: #{tpu_custom_call.1} parent=35 // pred_region
          %s296 = smul.u32 2, %s24
          %p297 = scmp.lt.s32.totalorder %s296, 3
          %s298 = scalar_select %p297, %s296, 3
          %s299 = smul.addr %s298, 16
          %s300 = smul.addr %s299, 8
          %s301 = scalar_lea.vmem %s0, %s300
          %s302 = smul.u32 2, %s24
        $region40: #{tpu_custom_call.1} parent=35 // pred_fallthru
          _
        // Predicated region
        $region41: #{tpu_custom_call.1} parent=35 // pred_check
          %p303 = pneg %p70
        $region42: #{tpu_custom_call.1} parent=35 // pred_check_branch
          %305 = sbr.rel (%p303) target = $region44
        $region43: #{tpu_custom_call.1} parent=35 // pred_region
          %s306 = smul.u32 2, %s24
          %p307 = scmp.lt.s32.totalorder %s306, 3
          %s308 = scalar_select %p307, %s306, 3
          %s309 = smul.addr %s308, 16
          %s310 = smul.addr %s309, 8
          %s311 = scalar_lea.vmem %s1, %s310
          %s312 = smul.u32 2, %s24
        $region44: #{tpu_custom_call.1} parent=35 // pred_fallthru
          _
        // Predicated region
        $region45: #{tpu_custom_call.1} parent=35 // pred_check
          %p313 = pneg %p96
        $region46: #{tpu_custom_call.1} parent=35 // pred_check_branch
          %315 = sbr.rel (%p313) target = $region48
        $region47: #{tpu_custom_call.1} parent=35 // pred_region
          %s316 = smul.u32 2, %s24
          %p317 = scmp.lt.s32.totalorder %s316, 3
          %s318 = scalar_select %p317, %s316, 3
          %s319 = smul.addr %s318, 16
          %s320 = smul.addr %s319, 8
          %s321 = scalar_lea.vmem %s2, %s320
          %s322 = smul.u32 2, %s24
        $region48: #{tpu_custom_call.1} parent=35 // pred_fallthru
          _
      $region36: #{tpu_custom_call.1} parent=5 // pred_fallthru
        _
      %p323 = scmp.le.s32.totalorder 1, %s24
      %p324 = scmp.lt.s32.totalorder %s24, 3
      %p325 = pnand %p323, %p324
      %p326 = pneg %p325
      // Predicated region
      $region49: #{tpu_custom_call.1} parent=5 // pred_check
        _
      $region50: #{tpu_custom_call.1} parent=5 // pred_check_branch
        %328 = sbr.rel (%p325) target = $region52
      $region51: #{tpu_custom_call.1} parent=5 // pred_region
        %s329 = ssub.s32 %s24, 1
        %s330 = smul.u32 2, %s29
        %p331 = scmp.lt.s32.totalorder %s330, 3
        %s332 = scalar_select %p331, %s330, 3
        %s333 = smul.addr %s332, 16
        %s334 = smul.addr %s333, 8
        %s335 = scalar_lea.vmem %s0, %s334
        %p336 = pneg %p50
        %p337 = pneg %p47
        %s338 = smul.u32 2, %s29
        %p339 = scmp.lt.s32.totalorder %s338, 3
        %s340 = scalar_select %p339, %s338, 3
        %s341 = smul.addr %s340, 16
        %s342 = smul.addr %s341, 8
        %s343 = scalar_lea.vmem %s1, %s342
        %p344 = pneg %p76
        %p345 = pneg %p73
        %s346 = smul.u32 2, %s29
        %p347 = scmp.lt.s32.totalorder %s346, 3
        %s348 = scalar_select %p347, %s346, 3
        %s349 = smul.addr %s348, 16
        %s350 = smul.addr %s349, 8
        %s351 = scalar_lea.vmem %s2, %s350
        %p352 = pneg %p102
        %p353 = pneg %p99
        %p354 = pneg %p123
        %p355 = pneg %p120
        %p356 = pneg %p144
        %p357 = pneg %p141
        %p358 = pneg %p165
        %p359 = pneg %p162
        %p360 = pneg %p186
        %p361 = pneg %p183
        %p362 = pneg %p207
        %p363 = pneg %p204
        %p364 = pneg %p233
        %p365 = pneg %p230
        %s366 = sand.u32 %s220, 1
        %s367 = scalar_lea.sflag [#allocation4], %s366
        %s368 = sand.u32 %s220, 1
        %s369 = smul.addr %s368, 2
        %s370 = scalar_lea.vmem [#allocation3], %s369
        %p371 = pneg %p259
        %p372 = pneg %p256
        %s373 = sand.u32 %s246, 1
        %s374 = scalar_lea.sflag [#allocation6], %s373
        %s375 = sand.u32 %s246, 1
        %s376 = smul.addr %s375, 2
        %s377 = scalar_lea.vmem [#allocation5], %s376
        %s378 = smul.u32 2, %s29
        %p379 = scmp.lt.s32.totalorder %s378, 3
        %s380 = scalar_select %p379, %s378, 3
        %s381 = smul.addr %s380, 16
        %s382 = smul.addr %s381, 8
        %s383 = scalar_lea.vmem %s0, %s382
        %s384 = smul.u32 2, %s29
        %s385 = smul.u32 2, %s29
        %p386 = scmp.lt.s32.totalorder %s385, 3
        %s387 = scalar_select %p386, %s385, 3
        %s388 = smul.addr %s387, 16
        %s389 = smul.addr %s388, 8
        %s390 = scalar_lea.vmem %s1, %s389
        %s391 = smul.u32 2, %s29
        %s392 = smul.u32 2, %s29
        %p393 = scmp.lt.s32.totalorder %s392, 3
        %s394 = scalar_select %p393, %s392, 3
        %s395 = smul.addr %s394, 16
        %s396 = smul.addr %s395, 8
        %s397 = scalar_lea.vmem %s2, %s396
        %s398 = smul.u32 2, %s29
        %s399 = smul.u32 2, %s29
        %s400 = smul.u32 2, %s29
        %v401 = vld [vmem:[%s383] sm:$0xff]
        %v402 = vld [vmem:[%s383 + $0x8] sm:$0xff]
        %v403 = vld [vmem:[%s383 + $0x10] sm:$0xff]
        %v404 = vld [vmem:[%s383 + $0x18] sm:$0xff]
        %v405 = vld [vmem:[%s383 + $0x20] sm:$0xff]
        %v406 = vld [vmem:[%s383 + $0x28] sm:$0xff]
        %v407 = vld [vmem:[%s383 + $0x30] sm:$0xff]
        %v408 = vld [vmem:[%s383 + $0x38] sm:$0xff]
        %v409 = vld [vmem:[%s383 + $0x40] sm:$0xff]
        %v410 = vld [vmem:[%s383 + $0x48] sm:$0xff]
        %v411 = vld [vmem:[%s383 + $0x50] sm:$0xff]
        %v412 = vld [vmem:[%s383 + $0x58] sm:$0xff]
        %v413 = vld [vmem:[%s383 + $0x60] sm:$0xff]
        %v414 = vld [vmem:[%s383 + $0x68] sm:$0xff]
        %v415 = vld [vmem:[%s383 + $0x70] sm:$0xff]
        %v416 = vld [vmem:[%s383 + $0x78] sm:$0xff]
        %v417 = vld [vmem:[%s383 + $0x80] sm:$0xff]
        %v418 = vld [vmem:[%s383 + $0x88] sm:$0xff]
        %v419 = vld [vmem:[%s383 + $0x90] sm:$0xff]
        %v420 = vld [vmem:[%s383 + $0x98] sm:$0xff]
        %v421 = vld [vmem:[%s383 + $0xa0] sm:$0xff]
        %v422 = vld [vmem:[%s383 + $0xa8] sm:$0xff]
        %v423 = vld [vmem:[%s383 + $0xb0] sm:$0xff]
        %v424 = vld [vmem:[%s383 + $0xb8] sm:$0xff]
        %v425 = vld [vmem:[%s383 + $0xc0] sm:$0xff]
        %v426 = vld [vmem:[%s383 + $0xc8] sm:$0xff]
        %v427 = vld [vmem:[%s383 + $0xd0] sm:$0xff]
        %v428 = vld [vmem:[%s383 + $0xd8] sm:$0xff]
        %v429 = vld [vmem:[%s383 + $0xe0] sm:$0xff]
        %v430 = vld [vmem:[%s383 + $0xe8] sm:$0xff]
        %v431 = vld [vmem:[%s383 + $0xf0] sm:$0xff]
        %v432 = vld [vmem:[%s383 + $0xf8] sm:$0xff]
        %v433 = vld [vmem:[%s3] sm:$0xff]
        %v434 = vld [vmem:[%s3 + $0x8] sm:$0xff]
        %v435 = vld [vmem:[%s3 + $0x10] sm:$0xff]
        %v436 = vld [vmem:[%s3 + $0x18] sm:$0xff]
        %vm437 = vcmask 261120
        %v439 = vsel %vm437, %v401, 0
        %v442 = vsel %vm437, %v402, 0
        %v445 = vsel %vm437, %v403, 0
        %v448 = vsel %vm437, %v404, 0
        %v451 = vsel %vm437, %v405, 0
        %v454 = vsel %vm437, %v406, 0
        %v457 = vsel %vm437, %v407, 0
        %v460 = vsel %vm437, %v408, 0
        %v463 = vsel %vm437, %v409, 0
        %v466 = vsel %vm437, %v410, 0
        %v469 = vsel %vm437, %v411, 0
        %v472 = vsel %vm437, %v412, 0
        %v475 = vsel %vm437, %v413, 0
        %v478 = vsel %vm437, %v414, 0
        %v481 = vsel %vm437, %v415, 0
        %v484 = vsel %vm437, %v416, 0
        %v487 = vsel %vm437, %v417, 0
        %v490 = vsel %vm437, %v418, 0
        %v493 = vsel %vm437, %v419, 0
        %v496 = vsel %vm437, %v420, 0
        %v499 = vsel %vm437, %v421, 0
        %v502 = vsel %vm437, %v422, 0
        %v505 = vsel %vm437, %v423, 0
        %v508 = vsel %vm437, %v424, 0
        %v511 = vsel %vm437, %v425, 0
        %v514 = vsel %vm437, %v426, 0
        %v517 = vsel %vm437, %v427, 0
        %v520 = vsel %vm437, %v428, 0
        %v523 = vsel %vm437, %v429, 0
        %v526 = vsel %vm437, %v430, 0
        %v529 = vsel %vm437, %v431, 0
        %v532 = vsel %vm437, %v432, 0
        %534 = vmatprep.subr.mxu0 0.0
        %535 = vmatpush1.msra.mxu0 %v433
        %536 = vmatprep.subr.mxu0 0.0
        %537 = vmatpush1.msra.mxu0 %v434
        %538 = vmatprep.subr.mxu0 0.0
        %539 = vmatpush1.msra.mxu0 %v435
        %540 = vmatprep.subr.mxu0 0.0
        %541 = vmatpush1.msra.mxu0 %v436
        %542 = vmatprep.subr.mxu0 0.0
        %543 = vmatpush1.msra.mxu0 0.0
        %544 = vmatprep.subr.mxu0 0.0
        %545 = vmatpush1.msra.mxu0 0.0
        %546 = vmatprep.subr.mxu0 0.0
        %547 = vmatpush1.msra.mxu0 0.0
        %548 = vmatprep.subr.mxu0 0.0
        %549 = vmatpush1.msra.mxu0 0.0
        %550 = vmatprep.subr.mxu0 0.0
        %551 = vmatpush1.msra.mxu0 0.0
        %552 = vmatprep.subr.mxu0 0.0
        %553 = vmatpush1.msra.mxu0 0.0
        %554 = vmatprep.subr.mxu0 0.0
        %555 = vmatpush1.msra.mxu0 0.0
        %556 = vmatprep.subr.mxu0 0.0
        %557 = vmatpush1.msra.mxu0 0.0
        %558 = vmatprep.subr.mxu0 0.0
        %559 = vmatpush1.msra.mxu0 0.0
        %560 = vmatprep.subr.mxu0 0.0
        %561 = vmatpush1.msra.mxu0 0.0
        %562 = vmatprep.subr.mxu0 0.0
        %563 = vmatpush1.msra.mxu0 0.0
        %564 = vmatprep.subr.mxu0 0.0
        %565 = vmatpush1.msra.mxu0 0.0
        %566 = vmatprep.subr.mxu0 0.0
        %567 = vmatpush1.msra.mxu0 0.0
        %568 = vmatprep.subr.mxu0 0.0
        %569 = vmatpush1.msra.mxu0 0.0
        %570 = vmatprep.subr.mxu0 0.0
        %571 = vmatpush1.msra.mxu0 0.0
        %572 = vmatprep.subr.mxu0 0.0
        %573 = vmatpush1.msra.mxu0 0.0
        %574 = vmatprep.subr.mxu0 0.0
        %575 = vmatpush1.msra.mxu0 0.0
        %576 = vmatprep.subr.mxu0 0.0
        %577 = vmatpush1.msra.mxu0 0.0
        %578 = vmatprep.subr.mxu0 0.0
        %579 = vmatpush1.msra.mxu0 0.0
        %580 = vmatprep.subr.mxu0 0.0
        %581 = vmatpush1.msra.mxu0 0.0
        %582 = vmatprep.subr.mxu0 0.0
        %583 = vmatpush1.msra.mxu0 0.0
        %584 = vmatprep.subr.mxu0 0.0
        %585 = vmatpush1.msra.mxu0 0.0
        %586 = vmatprep.subr.mxu0 0.0
        %587 = vmatpush1.msra.mxu0 0.0
        %588 = vmatprep.subr.mxu0 0.0
        %589 = vmatpush1.msra.mxu0 0.0
        %590 = vmatprep.subr.mxu0 0.0
        %591 = vmatpush1.msra.mxu0 0.0
        %592 = vmatprep.subr.mxu0 0.0
        %593 = vmatpush1.msra.mxu0 0.0
        %594 = vmatprep.subr.mxu0 0.0
        %595 = vmatpush1.msra.mxu0 0.0
        %596 = vmatprep.subr.mxu0 0.0
        %597 = vmatpush1.msra.mxu0 0.0
        %598 = vmatprep.mubr.f32.mxu0 0.0
        %599 = vmatmul.mubr.f32.gmra.mrb[0].mxu0 %v439
        %v600 = vpop.f32.mrb[0].mxu0
        %v601 = vadd.f32 0.0, %v600
        %v602 = vpop.f32.mrb[0].mxu0
        %603 = vmatprep.mubr.f32.mxu0 0.0
        %604 = vmatmul.mubr.f32.gmra.mrb[0].mxu0 %v442
        %v605 = vpop.f32.mrb[0].mxu0
        %v606 = vadd.f32 0.0, %v605
        %v607 = vpop.f32.mrb[0].mxu0
        %608 = vmatprep.mubr.f32.mxu0 0.0
        %609 = vmatmul.mubr.f32.gmra.mrb[0].mxu0 %v445
        %v610 = vpop.f32.mrb[0].mxu0
        %v611 = vadd.f32 0.0, %v610
        %v612 = vpop.f32.mrb[0].mxu0
        %613 = vmatprep.mubr.f32.mxu0 0.0
        %614 = vmatmul.mubr.f32.gmra.mrb[0].mxu0 %v448
        %v615 = vpop.f32.mrb[0].mxu0
        %v616 = vadd.f32 0.0, %v615
        %v617 = vpop.f32.mrb[0].mxu0
        %618 = vmatprep.mubr.f32.mxu0 0.0
        %619 = vmatmul.mubr.f32.gmra.mrb[0].mxu0 %v451
        %v620 = vpop.f32.mrb[0].mxu0
        %v621 = vadd.f32 0.0, %v620
        %v622 = vpop.f32.mrb[0].mxu0
        %623 = vmatprep.mubr.f32.mxu0 0.0
        %624 = vmatmul.mubr.f32.gmra.mrb[0].mxu0 %v454
        %v625 = vpop.f32.mrb[0].mxu0
        %v626 = vadd.f32 0.0, %v625
        %v627 = vpop.f32.mrb[0].mxu0
        %628 = vmatprep.mubr.f32.mxu0 0.0
        %629 = vmatmul.mubr.f32.gmra.mrb[0].mxu0 %v457
        %v630 = vpop.f32.mrb[0].mxu0
        %v631 = vadd.f32 0.0, %v630
        %v632 = vpop.f32.mrb[0].mxu0
        %633 = vmatprep.mubr.f32.mxu0 0.0
        %634 = vmatmul.mubr.f32.gmra.mrb[0].mxu0 %v460
        %v635 = vpop.f32.mrb[0].mxu0
        %v636 = vadd.f32 0.0, %v635
        %v637 = vpop.f32.mrb[0].mxu0
        %638 = vmatprep.mubr.f32.mxu0 0.0
        %639 = vmatmul.mubr.f32.gmra.mrb[0].mxu0 %v463
        %v640 = vpop.f32.mrb[0].mxu0
        %v641 = vadd.f32 0.0, %v640
        %v642 = vpop.f32.mrb[0].mxu0
        %643 = vmatprep.mubr.f32.mxu0 0.0
        %644 = vmatmul.mubr.f32.gmra.mrb[0].mxu0 %v466
        %v645 = vpop.f32.mrb[0].mxu0
        %v646 = vadd.f32 0.0, %v645
        %v647 = vpop.f32.mrb[0].mxu0
        %648 = vmatprep.mubr.f32.mxu0 0.0
        %649 = vmatmul.mubr.f32.gmra.mrb[0].mxu0 %v469
        %v650 = vpop.f32.mrb[0].mxu0
        %v651 = vadd.f32 0.0, %v650
        %v652 = vpop.f32.mrb[0].mxu0
        %653 = vmatprep.mubr.f32.mxu0 0.0
        %654 = vmatmul.mubr.f32.gmra.mrb[0].mxu0 %v472
        %v655 = vpop.f32.mrb[0].mxu0
        %v656 = vadd.f32 0.0, %v655
        %v657 = vpop.f32.mrb[0].mxu0
        %658 = vmatprep.mubr.f32.mxu0 0.0
        %659 = vmatmul.mubr.f32.gmra.mrb[0].mxu0 %v475
        %v660 = vpop.f32.mrb[0].mxu0
        %v661 = vadd.f32 0.0, %v660
        %v662 = vpop.f32.mrb[0].mxu0
        %663 = vmatprep.mubr.f32.mxu0 0.0
        %664 = vmatmul.mubr.f32.gmra.mrb[0].mxu0 %v478
        %v665 = vpop.f32.mrb[0].mxu0
        %v666 = vadd.f32 0.0, %v665
        %v667 = vpop.f32.mrb[0].mxu0
        %668 = vmatprep.mubr.f32.mxu0 0.0
        %669 = vmatmul.mubr.f32.gmra.mrb[0].mxu0 %v481
        %v670 = vpop.f32.mrb[0].mxu0
        %v671 = vadd.f32 0.0, %v670
        %v672 = vpop.f32.mrb[0].mxu0
        %673 = vmatprep.mubr.f32.mxu0 0.0
        %674 = vmatmul.mubr.f32.gmra.mrb[0].mxu0 %v484
        %v675 = vpop.f32.mrb[0].mxu0
        %v676 = vadd.f32 0.0, %v675
        %v677 = vpop.f32.mrb[0].mxu0
        %678 = vmatprep.mubr.f32.mxu0 0.0
        %679 = vmatmul.mubr.f32.gmra.mrb[0].mxu0 %v487
        %v680 = vpop.f32.mrb[0].mxu0
        %v681 = vadd.f32 0.0, %v680
        %v682 = vpop.f32.mrb[0].mxu0
        %683 = vmatprep.mubr.f32.mxu0 0.0
        %684 = vmatmul.mubr.f32.gmra.mrb[0].mxu0 %v490
        %v685 = vpop.f32.mrb[0].mxu0
        %v686 = vadd.f32 0.0, %v685
        %v687 = vpop.f32.mrb[0].mxu0
        %688 = vmatprep.mubr.f32.mxu0 0.0
        %689 = vmatmul.mubr.f32.gmra.mrb[0].mxu0 %v493
        %v690 = vpop.f32.mrb[0].mxu0
        %v691 = vadd.f32 0.0, %v690
        %v692 = vpop.f32.mrb[0].mxu0
        %693 = vmatprep.mubr.f32.mxu0 0.0
        %694 = vmatmul.mubr.f32.gmra.mrb[0].mxu0 %v496
        %v695 = vpop.f32.mrb[0].mxu0
        %v696 = vadd.f32 0.0, %v695
        %v697 = vpop.f32.mrb[0].mxu0
        %698 = vmatprep.mubr.f32.mxu0 0.0
        %699 = vmatmul.mubr.f32.gmra.mrb[0].mxu0 %v499
        %v700 = vpop.f32.mrb[0].mxu0
        %v701 = vadd.f32 0.0, %v700
        %v702 = vpop.f32.mrb[0].mxu0
        %703 = vmatprep.mubr.f32.mxu0 0.0
        %704 = vmatmul.mubr.f32.gmra.mrb[0].mxu0 %v502
        %v705 = vpop.f32.mrb[0].mxu0
        %v706 = vadd.f32 0.0, %v705
        %v707 = vpop.f32.mrb[0].mxu0
        %708 = vmatprep.mubr.f32.mxu0 0.0
        %709 = vmatmul.mubr.f32.gmra.mrb[0].mxu0 %v505
        %v710 = vpop.f32.mrb[0].mxu0
        %v711 = vadd.f32 0.0, %v710
        %v712 = vpop.f32.mrb[0].mxu0
        %713 = vmatprep.mubr.f32.mxu0 0.0
        %714 = vmatmul.mubr.f32.gmra.mrb[0].mxu0 %v508
        %v715 = vpop.f32.mrb[0].mxu0
        %v716 = vadd.f32 0.0, %v715
        %v717 = vpop.f32.mrb[0].mxu0
        %718 = vmatprep.mubr.f32.mxu0 0.0
        %719 = vmatmul.mubr.f32.gmra.mrb[0].mxu0 %v511
        %v720 = vpop.f32.mrb[0].mxu0
        %v721 = vadd.f32 0.0, %v720
        %v722 = vpop.f32.mrb[0].mxu0
        %723 = vmatprep.mubr.f32.mxu0 0.0
        %724 = vmatmul.mubr.f32.gmra.mrb[0].mxu0 %v514
        %v725 = vpop.f32.mrb[0].mxu0
        %v726 = vadd.f32 0.0, %v725
        %v727 = vpop.f32.mrb[0].mxu0
        %728 = vmatprep.mubr.f32.mxu0 0.0
        %729 = vmatmul.mubr.f32.gmra.mrb[0].mxu0 %v517
        %v730 = vpop.f32.mrb[0].mxu0
        %v731 = vadd.f32 0.0, %v730
        %v732 = vpop.f32.mrb[0].mxu0
        %733 = vmatprep.mubr.f32.mxu0 0.0
        %734 = vmatmul.mubr.f32.gmra.mrb[0].mxu0 %v520
        %v735 = vpop.f32.mrb[0].mxu0
        %v736 = vadd.f32 0.0, %v735
        %v737 = vpop.f32.mrb[0].mxu0
        %738 = vmatprep.mubr.f32.mxu0 0.0
        %739 = vmatmul.mubr.f32.gmra.mrb[0].mxu0 %v523
        %v740 = vpop.f32.mrb[0].mxu0
        %v741 = vadd.f32 0.0, %v740
        %v742 = vpop.f32.mrb[0].mxu0
        %743 = vmatprep.mubr.f32.mxu0 0.0
        %744 = vmatmul.mubr.f32.gmra.mrb[0].mxu0 %v526
        %v745 = vpop.f32.mrb[0].mxu0
        %v746 = vadd.f32 0.0, %v745
        %v747 = vpop.f32.mrb[0].mxu0
        %748 = vmatprep.mubr.f32.mxu0 0.0
        %749 = vmatmul.mubr.f32.gmra.mrb[0].mxu0 %v529
        %v750 = vpop.f32.mrb[0].mxu0
        %v751 = vadd.f32 0.0, %v750
        %v752 = vpop.f32.mrb[0].mxu0
        %753 = vmatprep.mubr.f32.mxu0 0.0
        %754 = vmatmul.mubr.f32.gmra.mrb[0].mxu0 %v532
        %v755 = vpop.f32.mrb[0].mxu0
        %v756 = vadd.f32 0.0, %v755
        %v757 = vpop.f32.mrb[0].mxu0
        %758 = vdwg.mxu0
        %v759 = vld [vmem:[%s390] sm:$0xff]
        %v760 = vld [vmem:[%s390 + $0x8] sm:$0xff]
        %v761 = vld [vmem:[%s390 + $0x10] sm:$0xff]
        %v762 = vld [vmem:[%s390 + $0x18] sm:$0xff]
        %v763 = vld [vmem:[%s390 + $0x20] sm:$0xff]
        %v764 = vld [vmem:[%s390 + $0x28] sm:$0xff]
        %v765 = vld [vmem:[%s390 + $0x30] sm:$0xff]
        %v766 = vld [vmem:[%s390 + $0x38] sm:$0xff]
        %v767 = vld [vmem:[%s390 + $0x40] sm:$0xff]
        %v768 = vld [vmem:[%s390 + $0x48] sm:$0xff]
        %v769 = vld [vmem:[%s390 + $0x50] sm:$0xff]
        %v770 = vld [vmem:[%s390 + $0x58] sm:$0xff]
        %v771 = vld [vmem:[%s390 + $0x60] sm:$0xff]
        %v772 = vld [vmem:[%s390 + $0x68] sm:$0xff]
        %v773 = vld [vmem:[%s390 + $0x70] sm:$0xff]
        %v774 = vld [vmem:[%s390 + $0x78] sm:$0xff]
        %v775 = vld [vmem:[%s390 + $0x80] sm:$0xff]
        %v776 = vld [vmem:[%s390 + $0x88] sm:$0xff]
        %v777 = vld [vmem:[%s390 + $0x90] sm:$0xff]
        %v778 = vld [vmem:[%s390 + $0x98] sm:$0xff]
        %v779 = vld [vmem:[%s390 + $0xa0] sm:$0xff]
        %v780 = vld [vmem:[%s390 + $0xa8] sm:$0xff]
        %v781 = vld [vmem:[%s390 + $0xb0] sm:$0xff]
        %v782 = vld [vmem:[%s390 + $0xb8] sm:$0xff]
        %v783 = vld [vmem:[%s390 + $0xc0] sm:$0xff]
        %v784 = vld [vmem:[%s390 + $0xc8] sm:$0xff]
        %v785 = vld [vmem:[%s390 + $0xd0] sm:$0xff]
        %v786 = vld [vmem:[%s390 + $0xd8] sm:$0xff]
        %v787 = vld [vmem:[%s390 + $0xe0] sm:$0xff]
        %v788 = vld [vmem:[%s390 + $0xe8] sm:$0xff]
        %v789 = vld [vmem:[%s390 + $0xf0] sm:$0xff]
        %v790 = vld [vmem:[%s390 + $0xf8] sm:$0xff]
        %v791 = vld [vmem:[%s4] sm:$0xff]
        %v792 = vld [vmem:[%s4 + $0x8] sm:$0xff]
        %v793 = vld [vmem:[%s4 + $0x10] sm:$0xff]
        %v794 = vld [vmem:[%s4 + $0x18] sm:$0xff]
        %v795 = vld [vmem:[%s5] sm:$0x1]
        %v797 = vlaneseq
        %v798 = vshrl.u32 %v797, 7
        %v799 = vsub.s32 0, %v798
        %v800 = vrot.slane %v795, %v799
        %v803 = vsel %vm437, %v759, 0
        %v806 = vsel %vm437, %v760, 0
        %v809 = vsel %vm437, %v761, 0
        %v812 = vsel %vm437, %v762, 0
        %v815 = vsel %vm437, %v763, 0
        %v818 = vsel %vm437, %v764, 0
        %v821 = vsel %vm437, %v765, 0
        %v824 = vsel %vm437, %v766, 0
        %v827 = vsel %vm437, %v767, 0
        %v830 = vsel %vm437, %v768, 0
        %v833 = vsel %vm437, %v769, 0
        %v836 = vsel %vm437, %v770, 0
        %v839 = vsel %vm437, %v771, 0
        %v842 = vsel %vm437, %v772, 0
        %v845 = vsel %vm437, %v773, 0
        %v848 = vsel %vm437, %v774, 0
        %v851 = vsel %vm437, %v775, 0
        %v854 = vsel %vm437, %v776, 0
        %v857 = vsel %vm437, %v777, 0
        %v860 = vsel %vm437, %v778, 0
        %v863 = vsel %vm437, %v779, 0
        %v866 = vsel %vm437, %v780, 0
        %v869 = vsel %vm437, %v781, 0
        %v872 = vsel %vm437, %v782, 0
        %v875 = vsel %vm437, %v783, 0
        %v878 = vsel %vm437, %v784, 0
        %v881 = vsel %vm437, %v785, 0
        %v884 = vsel %vm437, %v786, 0
        %v887 = vsel %vm437, %v787, 0
        %v890 = vsel %vm437, %v788, 0
        %v893 = vsel %vm437, %v789, 0
        %v896 = vsel %vm437, %v790, 0
        %898 = vmatprep.subr.mxu0 0.0
        %899 = vmatpush1.msra.mxu0 %v791
        %900 = vmatprep.subr.mxu0 0.0
        %901 = vmatpush1.msra.mxu0 %v792
        %902 = vmatprep.subr.mxu0 0.0
        %903 = vmatpush1.msra.mxu0 %v793
        %904 = vmatprep.subr.mxu0 0.0
        %905 = vmatpush1.msra.mxu0 %v794
        %906 = vmatprep.subr.mxu0 0.0
        %907 = vmatpush1.msra.mxu0 0.0
        %908 = vmatprep.subr.mxu0 0.0
        %909 = vmatpush1.msra.mxu0 0.0
        %910 = vmatprep.subr.mxu0 0.0
        %911 = vmatpush1.msra.mxu0 0.0
        %912 = vmatprep.subr.mxu0 0.0
        %913 = vmatpush1.msra.mxu0 0.0
        %914 = vmatprep.subr.mxu0 0.0
        %915 = vmatpush1.msra.mxu0 0.0
        %916 = vmatprep.subr.mxu0 0.0
        %917 = vmatpush1.msra.mxu0 0.0
        %918 = vmatprep.subr.mxu0 0.0
        %919 = vmatpush1.msra.mxu0 0.0
        %920 = vmatprep.subr.mxu0 0.0
        %921 = vmatpush1.msra.mxu0 0.0
        %922 = vmatprep.subr.mxu0 0.0
        %923 = vmatpush1.msra.mxu0 0.0
        %924 = vmatprep.subr.mxu0 0.0
        %925 = vmatpush1.msra.mxu0 0.0
        %926 = vmatprep.subr.mxu0 0.0
        %927 = vmatpush1.msra.mxu0 0.0
        %928 = vmatprep.subr.mxu0 0.0
        %929 = vmatpush1.msra.mxu0 0.0
        %930 = vmatprep.subr.mxu0 0.0
        %931 = vmatpush1.msra.mxu0 0.0
        %932 = vmatprep.subr.mxu0 0.0
        %933 = vmatpush1.msra.mxu0 0.0
        %934 = vmatprep.subr.mxu0 0.0
        %935 = vmatpush1.msra.mxu0 0.0
        %936 = vmatprep.subr.mxu0 0.0
        %937 = vmatpush1.msra.mxu0 0.0
        %938 = vmatprep.subr.mxu0 0.0
        %939 = vmatpush1.msra.mxu0 0.0
        %940 = vmatprep.subr.mxu0 0.0
        %941 = vmatpush1.msra.mxu0 0.0
        %942 = vmatprep.subr.mxu0 0.0
        %943 = vmatpush1.msra.mxu0 0.0
        %944 = vmatprep.subr.mxu0 0.0
        %945 = vmatpush1.msra.mxu0 0.0
        %946 = vmatprep.subr.mxu0 0.0
        %947 = vmatpush1.msra.mxu0 0.0
        %948 = vmatprep.subr.mxu0 0.0
        %949 = vmatpush1.msra.mxu0 0.0
        %950 = vmatprep.subr.mxu0 0.0
        %951 = vmatpush1.msra.mxu0 0.0
        %952 = vmatprep.subr.mxu0 0.0
        %953 = vmatpush1.msra.mxu0 0.0
        %954 = vmatprep.subr.mxu0 0.0
        %955 = vmatpush1.msra.mxu0 0.0
        %956 = vmatprep.subr.mxu0 0.0
        %957 = vmatpush1.msra.mxu0 0.0
        %958 = vmatprep.subr.mxu0 0.0
        %959 = vmatpush1.msra.mxu0 0.0
        %960 = vmatprep.subr.mxu0 0.0
        %961 = vmatpush1.msra.mxu0 0.0
        %962 = vmatprep.mubr.f32.mxu0 0.0
        %963 = vmatmul.mubr.f32.gmra.mrb[0].mxu0 %v803
        %v964 = vpop.f32.mrb[0].mxu0
        %v965 = vadd.f32 %v800, %v964
        %v966 = vpop.f32.mrb[0].mxu0
        %967 = vmatprep.mubr.f32.mxu0 0.0
        %968 = vmatmul.mubr.f32.gmra.mrb[0].mxu0 %v806
        %v969 = vpop.f32.mrb[0].mxu0
        %v970 = vadd.f32 %v800, %v969
        %v971 = vpop.f32.mrb[0].mxu0
        %972 = vmatprep.mubr.f32.mxu0 0.0
        %973 = vmatmul.mubr.f32.gmra.mrb[0].mxu0 %v809
        %v974 = vpop.f32.mrb[0].mxu0
        %v975 = vadd.f32 %v800, %v974
        %v976 = vpop.f32.mrb[0].mxu0
        %977 = vmatprep.mubr.f32.mxu0 0.0
        %978 = vmatmul.mubr.f32.gmra.mrb[0].mxu0 %v812
        %v979 = vpop.f32.mrb[0].mxu0
        %v980 = vadd.f32 %v800, %v979
        %v981 = vpop.f32.mrb[0].mxu0
        %982 = vmatprep.mubr.f32.mxu0 0.0
        %983 = vmatmul.mubr.f32.gmra.mrb[0].mxu0 %v815
        %v984 = vpop.f32.mrb[0].mxu0
        %v985 = vadd.f32 %v800, %v984
        %v986 = vpop.f32.mrb[0].mxu0
        %987 = vmatprep.mubr.f32.mxu0 0.0
        %988 = vmatmul.mubr.f32.gmra.mrb[0].mxu0 %v818
        %v989 = vpop.f32.mrb[0].mxu0
        %v990 = vadd.f32 %v800, %v989
        %v991 = vpop.f32.mrb[0].mxu0
        %992 = vmatprep.mubr.f32.mxu0 0.0
        %993 = vmatmul.mubr.f32.gmra.mrb[0].mxu0 %v821
        %v994 = vpop.f32.mrb[0].mxu0
        %v995 = vadd.f32 %v800, %v994
        %v996 = vpop.f32.mrb[0].mxu0
        %997 = vmatprep.mubr.f32.mxu0 0.0
        %998 = vmatmul.mubr.f32.gmra.mrb[0].mxu0 %v824
        %v999 = vpop.f32.mrb[0].mxu0
        %v1000 = vadd.f32 %v800, %v999
        %v1001 = vpop.f32.mrb[0].mxu0
        %1002 = vmatprep.mubr.f32.mxu0 0.0
        %1003 = vmatmul.mubr.f32.gmra.mrb[0].mxu0 %v827
        %v1004 = vpop.f32.mrb[0].mxu0
        %v1005 = vadd.f32 %v800, %v1004
        %v1006 = vpop.f32.mrb[0].mxu0
        %1007 = vmatprep.mubr.f32.mxu0 0.0
        %1008 = vmatmul.mubr.f32.gmra.mrb[0].mxu0 %v830
        %v1009 = vpop.f32.mrb[0].mxu0
        %v1010 = vadd.f32 %v800, %v1009
        %v1011 = vpop.f32.mrb[0].mxu0
        %1012 = vmatprep.mubr.f32.mxu0 0.0
        %1013 = vmatmul.mubr.f32.gmra.mrb[0].mxu0 %v833
        %v1014 = vpop.f32.mrb[0].mxu0
        %v1015 = vadd.f32 %v800, %v1014
        %v1016 = vpop.f32.mrb[0].mxu0
        %1017 = vmatprep.mubr.f32.mxu0 0.0
        %1018 = vmatmul.mubr.f32.gmra.mrb[0].mxu0 %v836
        %v1019 = vpop.f32.mrb[0].mxu0
        %v1020 = vadd.f32 %v800, %v1019
        %v1021 = vpop.f32.mrb[0].mxu0
        %1022 = vmatprep.mubr.f32.mxu0 0.0
        %1023 = vmatmul.mubr.f32.gmra.mrb[0].mxu0 %v839
        %v1024 = vpop.f32.mrb[0].mxu0
        %v1025 = vadd.f32 %v800, %v1024
        %v1026 = vpop.f32.mrb[0].mxu0
        %1027 = vmatprep.mubr.f32.mxu0 0.0
        %1028 = vmatmul.mubr.f32.gmra.mrb[0].mxu0 %v842
        %v1029 = vpop.f32.mrb[0].mxu0
        %v1030 = vadd.f32 %v800, %v1029
        %v1031 = vpop.f32.mrb[0].mxu0
        %1032 = vmatprep.mubr.f32.mxu0 0.0
        %1033 = vmatmul.mubr.f32.gmra.mrb[0].mxu0 %v845
        %v1034 = vpop.f32.mrb[0].mxu0
        %v1035 = vadd.f32 %v800, %v1034
        %v1036 = vpop.f32.mrb[0].mxu0
        %1037 = vmatprep.mubr.f32.mxu0 0.0
        %1038 = vmatmul.mubr.f32.gmra.mrb[0].mxu0 %v848
        %v1039 = vpop.f32.mrb[0].mxu0
        %v1040 = vadd.f32 %v800, %v1039
        %v1041 = vpop.f32.mrb[0].mxu0
        %1042 = vmatprep.mubr.f32.mxu0 0.0
        %1043 = vmatmul.mubr.f32.gmra.mrb[0].mxu0 %v851
        %v1044 = vpop.f32.mrb[0].mxu0
        %v1045 = vadd.f32 %v800, %v1044
        %v1046 = vpop.f32.mrb[0].mxu0
        %1047 = vmatprep.mubr.f32.mxu0 0.0
        %1048 = vmatmul.mubr.f32.gmra.mrb[0].mxu0 %v854
        %v1049 = vpop.f32.mrb[0].mxu0
        %v1050 = vadd.f32 %v800, %v1049
        %v1051 = vpop.f32.mrb[0].mxu0
        %1052 = vmatprep.mubr.f32.mxu0 0.0
        %1053 = vmatmul.mubr.f32.gmra.mrb[0].mxu0 %v857
        %v1054 = vpop.f32.mrb[0].mxu0
        %v1055 = vadd.f32 %v800, %v1054
        %v1056 = vpop.f32.mrb[0].mxu0
        %1057 = vmatprep.mubr.f32.mxu0 0.0
        %1058 = vmatmul.mubr.f32.gmra.mrb[0].mxu0 %v860
        %v1059 = vpop.f32.mrb[0].mxu0
        %v1060 = vadd.f32 %v800, %v1059
        %v1061 = vpop.f32.mrb[0].mxu0
        %1062 = vmatprep.mubr.f32.mxu0 0.0
        %1063 = vmatmul.mubr.f32.gmra.mrb[0].mxu0 %v863
        %v1064 = vpop.f32.mrb[0].mxu0
        %v1065 = vadd.f32 %v800, %v1064
        %v1066 = vpop.f32.mrb[0].mxu0
        %1067 = vmatprep.mubr.f32.mxu0 0.0
        %1068 = vmatmul.mubr.f32.gmra.mrb[0].mxu0 %v866
        %v1069 = vpop.f32.mrb[0].mxu0
        %v1070 = vadd.f32 %v800, %v1069
        %v1071 = vpop.f32.mrb[0].mxu0
        %1072 = vmatprep.mubr.f32.mxu0 0.0
        %1073 = vmatmul.mubr.f32.gmra.mrb[0].mxu0 %v869
        %v1074 = vpop.f32.mrb[0].mxu0
        %v1075 = vadd.f32 %v800, %v1074
        %v1076 = vpop.f32.mrb[0].mxu0
        %1077 = vmatprep.mubr.f32.mxu0 0.0
        %1078 = vmatmul.mubr.f32.gmra.mrb[0].mxu0 %v872
        %v1079 = vpop.f32.mrb[0].mxu0
        %v1080 = vadd.f32 %v800, %v1079
        %v1081 = vpop.f32.mrb[0].mxu0
        %1082 = vmatprep.mubr.f32.mxu0 0.0
        %1083 = vmatmul.mubr.f32.gmra.mrb[0].mxu0 %v875
        %v1084 = vpop.f32.mrb[0].mxu0
        %v1085 = vadd.f32 %v800, %v1084
        %v1086 = vpop.f32.mrb[0].mxu0
        %1087 = vmatprep.mubr.f32.mxu0 0.0
        %1088 = vmatmul.mubr.f32.gmra.mrb[0].mxu0 %v878
        %v1089 = vpop.f32.mrb[0].mxu0
        %v1090 = vadd.f32 %v800, %v1089
        %v1091 = vpop.f32.mrb[0].mxu0
        %1092 = vmatprep.mubr.f32.mxu0 0.0
        %1093 = vmatmul.mubr.f32.gmra.mrb[0].mxu0 %v881
        %v1094 = vpop.f32.mrb[0].mxu0
        %v1095 = vadd.f32 %v800, %v1094
        %v1096 = vpop.f32.mrb[0].mxu0
        %1097 = vmatprep.mubr.f32.mxu0 0.0
        %1098 = vmatmul.mubr.f32.gmra.mrb[0].mxu0 %v884
        %v1099 = vpop.f32.mrb[0].mxu0
        %v1100 = vadd.f32 %v800, %v1099
        %v1101 = vpop.f32.mrb[0].mxu0
        %1102 = vmatprep.mubr.f32.mxu0 0.0
        %1103 = vmatmul.mubr.f32.gmra.mrb[0].mxu0 %v887
        %v1104 = vpop.f32.mrb[0].mxu0
        %v1105 = vadd.f32 %v800, %v1104
        %v1106 = vpop.f32.mrb[0].mxu0
        %1107 = vmatprep.mubr.f32.mxu0 0.0
        %1108 = vmatmul.mubr.f32.gmra.mrb[0].mxu0 %v890
        %v1109 = vpop.f32.mrb[0].mxu0
        %v1110 = vadd.f32 %v800, %v1109
        %v1111 = vpop.f32.mrb[0].mxu0
        %1112 = vmatprep.mubr.f32.mxu0 0.0
        %1113 = vmatmul.mubr.f32.gmra.mrb[0].mxu0 %v893
        %v1114 = vpop.f32.mrb[0].mxu0
        %v1115 = vadd.f32 %v800, %v1114
        %v1116 = vpop.f32.mrb[0].mxu0
        %1117 = vmatprep.mubr.f32.mxu0 0.0
        %1118 = vmatmul.mubr.f32.gmra.mrb[0].mxu0 %v896
        %v1119 = vpop.f32.mrb[0].mxu0
        %v1120 = vadd.f32 %v800, %v1119
        %v1121 = vpop.f32.mrb[0].mxu0
        %1122 = vdwg.mxu0
        %v1123 = vadd.f32 %v601, %v965
        %v1124 = vadd.f32 %v606, %v970
        %v1125 = vadd.f32 %v611, %v975
        %v1126 = vadd.f32 %v616, %v980
        %v1127 = vadd.f32 %v621, %v985
        %v1128 = vadd.f32 %v626, %v990
        %v1129 = vadd.f32 %v631, %v995
        %v1130 = vadd.f32 %v636, %v1000
        %v1131 = vadd.f32 %v641, %v1005
        %v1132 = vadd.f32 %v646, %v1010
        %v1133 = vadd.f32 %v651, %v1015
        %v1134 = vadd.f32 %v656, %v1020
        %v1135 = vadd.f32 %v661, %v1025
        %v1136 = vadd.f32 %v666, %v1030
        %v1137 = vadd.f32 %v671, %v1035
        %v1138 = vadd.f32 %v676, %v1040
        %v1139 = vadd.f32 %v681, %v1045
        %v1140 = vadd.f32 %v686, %v1050
        %v1141 = vadd.f32 %v691, %v1055
        %v1142 = vadd.f32 %v696, %v1060
        %v1143 = vadd.f32 %v701, %v1065
        %v1144 = vadd.f32 %v706, %v1070
        %v1145 = vadd.f32 %v711, %v1075
        %v1146 = vadd.f32 %v716, %v1080
        %v1147 = vadd.f32 %v721, %v1085
        %v1148 = vadd.f32 %v726, %v1090
        %v1149 = vadd.f32 %v731, %v1095
        %v1150 = vadd.f32 %v736, %v1100
        %v1151 = vadd.f32 %v741, %v1105
        %v1152 = vadd.f32 %v746, %v1110
        %v1153 = vadd.f32 %v751, %v1115
        %v1154 = vadd.f32 %v756, %v1120
        %v1155 = vxor.u32 %v1123, 2147483648
        %v1156 = vxor.u32 %v1124, 2147483648
        %v1157 = vxor.u32 %v1125, 2147483648
        %v1158 = vxor.u32 %v1126, 2147483648
        %v1159 = vxor.u32 %v1127, 2147483648
        %v1160 = vxor.u32 %v1128, 2147483648
        %v1161 = vxor.u32 %v1129, 2147483648
        %v1162 = vxor.u32 %v1130, 2147483648
        %v1163 = vxor.u32 %v1131, 2147483648
        %v1164 = vxor.u32 %v1132, 2147483648
        %v1165 = vxor.u32 %v1133, 2147483648
        %v1166 = vxor.u32 %v1134, 2147483648
        %v1167 = vxor.u32 %v1135, 2147483648
        %v1168 = vxor.u32 %v1136, 2147483648
        %v1169 = vxor.u32 %v1137, 2147483648
        %v1170 = vxor.u32 %v1138, 2147483648
        %v1171 = vxor.u32 %v1139, 2147483648
        %v1172 = vxor.u32 %v1140, 2147483648
        %v1173 = vxor.u32 %v1141, 2147483648
        %v1174 = vxor.u32 %v1142, 2147483648
        %v1175 = vxor.u32 %v1143, 2147483648
        %v1176 = vxor.u32 %v1144, 2147483648
        %v1177 = vxor.u32 %v1145, 2147483648
        %v1178 = vxor.u32 %v1146, 2147483648
        %v1179 = vxor.u32 %v1147, 2147483648
        %v1180 = vxor.u32 %v1148, 2147483648
        %v1181 = vxor.u32 %v1149, 2147483648
        %v1182 = vxor.u32 %v1150, 2147483648
        %v1183 = vxor.u32 %v1151, 2147483648
        %v1184 = vxor.u32 %v1152, 2147483648
        %v1185 = vxor.u32 %v1153, 2147483648
        %v1186 = vxor.u32 %v1154, 2147483648
        %v1187 = vmul.f32 %v1155, 1.442695
        %v1188 = vpow.pop %v1187
        %v1189 = vmul.f32 %v1156, 1.442695
        %v1190 = vpow.pop %v1189
        %v1191 = vmul.f32 %v1157, 1.442695
        %v1192 = vpow.pop %v1191
        %v1193 = vmul.f32 %v1158, 1.442695
        %v1194 = vpow.pop %v1193
        %v1195 = vmul.f32 %v1159, 1.442695
        %v1196 = vpow.pop %v1195
        %v1197 = vmul.f32 %v1160, 1.442695
        %v1198 = vpow.pop %v1197
        %v1199 = vmul.f32 %v1161, 1.442695
        %v1200 = vpow.pop %v1199
        %v1201 = vmul.f32 %v1162, 1.442695
        %v1202 = vpow.pop %v1201
        %v1203 = vmul.f32 %v1163, 1.442695
        %v1204 = vpow.pop %v1203
        %v1205 = vmul.f32 %v1164, 1.442695
        %v1206 = vpow.pop %v1205
        %v1207 = vmul.f32 %v1165, 1.442695
        %v1208 = vpow.pop %v1207
        %v1209 = vmul.f32 %v1166, 1.442695
        %v1210 = vpow.pop %v1209
        %v1211 = vmul.f32 %v1167, 1.442695
        %v1212 = vpow.pop %v1211
        %v1213 = vmul.f32 %v1168, 1.442695
        %v1214 = vpow.pop %v1213
        %v1215 = vmul.f32 %v1169, 1.442695
        %v1216 = vpow.pop %v1215
        %v1217 = vmul.f32 %v1170, 1.442695
        %v1218 = vpow.pop %v1217
        %v1219 = vmul.f32 %v1171, 1.442695
        %v1220 = vpow.pop %v1219
        %v1221 = vmul.f32 %v1172, 1.442695
        %v1222 = vpow.pop %v1221
        %v1223 = vmul.f32 %v1173, 1.442695
        %v1224 = vpow.pop %v1223
        %v1225 = vmul.f32 %v1174, 1.442695
        %v1226 = vpow.pop %v1225
        %v1227 = vmul.f32 %v1175, 1.442695
        %v1228 = vpow.pop %v1227
        %v1229 = vmul.f32 %v1176, 1.442695
        %v1230 = vpow.pop %v1229
        %v1231 = vmul.f32 %v1177, 1.442695
        %v1232 = vpow.pop %v1231
        %v1233 = vmul.f32 %v1178, 1.442695
        %v1234 = vpow.pop %v1233
        %v1235 = vmul.f32 %v1179, 1.442695
        %v1236 = vpow.pop %v1235
        %v1237 = vmul.f32 %v1180, 1.442695
        %v1238 = vpow.pop %v1237
        %v1239 = vmul.f32 %v1181, 1.442695
        %v1240 = vpow.pop %v1239
        %v1241 = vmul.f32 %v1182, 1.442695
        %v1242 = vpow.pop %v1241
        %v1243 = vmul.f32 %v1183, 1.442695
        %v1244 = vpow.pop %v1243
        %v1245 = vmul.f32 %v1184, 1.442695
        %v1246 = vpow.pop %v1245
        %v1247 = vmul.f32 %v1185, 1.442695
        %v1248 = vpow.pop %v1247
        %v1249 = vmul.f32 %v1186, 1.442695
        %v1250 = vpow.pop %v1249
        %v1251 = vadd.f32 %v1188, 1.0
        %v1252 = vadd.f32 %v1190, 1.0
        %v1253 = vadd.f32 %v1192, 1.0
        %v1254 = vadd.f32 %v1194, 1.0
        %v1255 = vadd.f32 %v1196, 1.0
        %v1256 = vadd.f32 %v1198, 1.0
        %v1257 = vadd.f32 %v1200, 1.0
        %v1258 = vadd.f32 %v1202, 1.0
        %v1259 = vadd.f32 %v1204, 1.0
        %v1260 = vadd.f32 %v1206, 1.0
        %v1261 = vadd.f32 %v1208, 1.0
        %v1262 = vadd.f32 %v1210, 1.0
        %v1263 = vadd.f32 %v1212, 1.0
        %v1264 = vadd.f32 %v1214, 1.0
        %v1265 = vadd.f32 %v1216, 1.0
        %v1266 = vadd.f32 %v1218, 1.0
        %v1267 = vadd.f32 %v1220, 1.0
        %v1268 = vadd.f32 %v1222, 1.0
        %v1269 = vadd.f32 %v1224, 1.0
        %v1270 = vadd.f32 %v1226, 1.0
        %v1271 = vadd.f32 %v1228, 1.0
        %v1272 = vadd.f32 %v1230, 1.0
        %v1273 = vadd.f32 %v1232, 1.0
        %v1274 = vadd.f32 %v1234, 1.0
        %v1275 = vadd.f32 %v1236, 1.0
        %v1276 = vadd.f32 %v1238, 1.0
        %v1277 = vadd.f32 %v1240, 1.0
        %v1278 = vadd.f32 %v1242, 1.0
        %v1279 = vadd.f32 %v1244, 1.0
        %v1280 = vadd.f32 %v1246, 1.0
        %v1281 = vadd.f32 %v1248, 1.0
        %v1282 = vadd.f32 %v1250, 1.0
        %v1283 = vrcp.pop %v1251
        %v1284 = vmul.f32 1.0, %v1283
        %v1285 = vrcp.pop %v1252
        %v1286 = vmul.f32 1.0, %v1285
        %v1287 = vrcp.pop %v1253
        %v1288 = vmul.f32 1.0, %v1287
        %v1289 = vrcp.pop %v1254
        %v1290 = vmul.f32 1.0, %v1289
        %v1291 = vrcp.pop %v1255
        %v1292 = vmul.f32 1.0, %v1291
        %v1293 = vrcp.pop %v1256
        %v1294 = vmul.f32 1.0, %v1293
        %v1295 = vrcp.pop %v1257
        %v1296 = vmul.f32 1.0, %v1295
        %v1297 = vrcp.pop %v1258
        %v1298 = vmul.f32 1.0, %v1297
        %v1299 = vrcp.pop %v1259
        %v1300 = vmul.f32 1.0, %v1299
        %v1301 = vrcp.pop %v1260
        %v1302 = vmul.f32 1.0, %v1301
        %v1303 = vrcp.pop %v1261
        %v1304 = vmul.f32 1.0, %v1303
        %v1305 = vrcp.pop %v1262
        %v1306 = vmul.f32 1.0, %v1305
        %v1307 = vrcp.pop %v1263
        %v1308 = vmul.f32 1.0, %v1307
        %v1309 = vrcp.pop %v1264
        %v1310 = vmul.f32 1.0, %v1309
        %v1311 = vrcp.pop %v1265
        %v1312 = vmul.f32 1.0, %v1311
        %v1313 = vrcp.pop %v1266
        %v1314 = vmul.f32 1.0, %v1313
        %v1315 = vrcp.pop %v1267
        %v1316 = vmul.f32 1.0, %v1315
        %v1317 = vrcp.pop %v1268
        %v1318 = vmul.f32 1.0, %v1317
        %v1319 = vrcp.pop %v1269
        %v1320 = vmul.f32 1.0, %v1319
        %v1321 = vrcp.pop %v1270
        %v1322 = vmul.f32 1.0, %v1321
        %v1323 = vrcp.pop %v1271
        %v1324 = vmul.f32 1.0, %v1323
        %v1325 = vrcp.pop %v1272
        %v1326 = vmul.f32 1.0, %v1325
        %v1327 = vrcp.pop %v1273
        %v1328 = vmul.f32 1.0, %v1327
        %v1329 = vrcp.pop %v1274
        %v1330 = vmul.f32 1.0, %v1329
        %v1331 = vrcp.pop %v1275
        %v1332 = vmul.f32 1.0, %v1331
        %v1333 = vrcp.pop %v1276
        %v1334 = vmul.f32 1.0, %v1333
        %v1335 = vrcp.pop %v1277
        %v1336 = vmul.f32 1.0, %v1335
        %v1337 = vrcp.pop %v1278
        %v1338 = vmul.f32 1.0, %v1337
        %v1339 = vrcp.pop %v1279
        %v1340 = vmul.f32 1.0, %v1339
        %v1341 = vrcp.pop %v1280
        %v1342 = vmul.f32 1.0, %v1341
        %v1343 = vrcp.pop %v1281
        %v1344 = vmul.f32 1.0, %v1343
        %v1345 = vrcp.pop %v1282
        %v1346 = vmul.f32 1.0, %v1345
        %v1347 = vld [vmem:[%s6] sm:$0x1]
        %v1349 = vlaneseq
        %v1350 = vshrl.u32 %v1349, 7
        %v1351 = vsub.s32 0, %v1350
        %v1352 = vrot.slane %v1347, %v1351
        %v1354 = vmul.f32 %v1284, %v1352
        %v1355 = vmul.f32 %v1286, %v1352
        %v1356 = vmul.f32 %v1288, %v1352
        %v1357 = vmul.f32 %v1290, %v1352
        %v1358 = vmul.f32 %v1292, %v1352
        %v1359 = vmul.f32 %v1294, %v1352
        %v1360 = vmul.f32 %v1296, %v1352
        %v1361 = vmul.f32 %v1298, %v1352
        %v1362 = vmul.f32 %v1300, %v1352
        %v1363 = vmul.f32 %v1302, %v1352
        %v1364 = vmul.f32 %v1304, %v1352
        %v1365 = vmul.f32 %v1306, %v1352
        %v1366 = vmul.f32 %v1308, %v1352
        %v1367 = vmul.f32 %v1310, %v1352
        %v1368 = vmul.f32 %v1312, %v1352
        %v1369 = vmul.f32 %v1314, %v1352
        %v1370 = vmul.f32 %v1316, %v1352
        %v1371 = vmul.f32 %v1318, %v1352
        %v1372 = vmul.f32 %v1320, %v1352
        %v1373 = vmul.f32 %v1322, %v1352
        %v1374 = vmul.f32 %v1324, %v1352
        %v1375 = vmul.f32 %v1326, %v1352
        %v1376 = vmul.f32 %v1328, %v1352
        %v1377 = vmul.f32 %v1330, %v1352
        %v1378 = vmul.f32 %v1332, %v1352
        %v1379 = vmul.f32 %v1334, %v1352
        %v1380 = vmul.f32 %v1336, %v1352
        %v1381 = vmul.f32 %v1338, %v1352
        %v1382 = vmul.f32 %v1340, %v1352
        %v1383 = vmul.f32 %v1342, %v1352
        %v1384 = vmul.f32 %v1344, %v1352
        %v1385 = vmul.f32 %v1346, %v1352
        %vm1386 = vcmask 392192
        %v1387 = vsel %vm1386, %v1354, 0.0
        %1388 = vadd.xlane.f32.xlu0 %v1387
        %v1389 = vpop.xlane.xlu0 %1388
        %v1390 = vsel %vm1386, %v1355, 0.0
        %1391 = vadd.xlane.f32.xlu0 %v1390
        %v1392 = vpop.xlane.xlu0 %1391
        %v1393 = vsel %vm1386, %v1356, 0.0
        %1394 = vadd.xlane.f32.xlu0 %v1393
        %v1395 = vpop.xlane.xlu0 %1394
        %v1396 = vsel %vm1386, %v1357, 0.0
        %1397 = vadd.xlane.f32.xlu0 %v1396
        %v1398 = vpop.xlane.xlu0 %1397
        %v1399 = vsel %vm1386, %v1358, 0.0
        %1400 = vadd.xlane.f32.xlu0 %v1399
        %v1401 = vpop.xlane.xlu0 %1400
        %v1402 = vsel %vm1386, %v1359, 0.0
        %1403 = vadd.xlane.f32.xlu0 %v1402
        %v1404 = vpop.xlane.xlu0 %1403
        %v1405 = vsel %vm1386, %v1360, 0.0
        %1406 = vadd.xlane.f32.xlu0 %v1405
        %v1407 = vpop.xlane.xlu0 %1406
        %v1408 = vsel %vm1386, %v1361, 0.0
        %1409 = vadd.xlane.f32.xlu0 %v1408
        %v1410 = vpop.xlane.xlu0 %1409
        %v1411 = vsel %vm1386, %v1362, 0.0
        %1412 = vadd.xlane.f32.xlu0 %v1411
        %v1413 = vpop.xlane.xlu0 %1412
        %v1414 = vsel %vm1386, %v1363, 0.0
        %1415 = vadd.xlane.f32.xlu0 %v1414
        %v1416 = vpop.xlane.xlu0 %1415
        %v1417 = vsel %vm1386, %v1364, 0.0
        %1418 = vadd.xlane.f32.xlu0 %v1417
        %v1419 = vpop.xlane.xlu0 %1418
        %v1420 = vsel %vm1386, %v1365, 0.0
        %1421 = vadd.xlane.f32.xlu0 %v1420
        %v1422 = vpop.xlane.xlu0 %1421
        %v1423 = vsel %vm1386, %v1366, 0.0
        %1424 = vadd.xlane.f32.xlu0 %v1423
        %v1425 = vpop.xlane.xlu0 %1424
        %v1426 = vsel %vm1386, %v1367, 0.0
        %1427 = vadd.xlane.f32.xlu0 %v1426
        %v1428 = vpop.xlane.xlu0 %1427
        %v1429 = vsel %vm1386, %v1368, 0.0
        %1430 = vadd.xlane.f32.xlu0 %v1429
        %v1431 = vpop.xlane.xlu0 %1430
        %v1432 = vsel %vm1386, %v1369, 0.0
        %1433 = vadd.xlane.f32.xlu0 %v1432
        %v1434 = vpop.xlane.xlu0 %1433
        %v1435 = vsel %vm1386, %v1370, 0.0
        %1436 = vadd.xlane.f32.xlu0 %v1435
        %v1437 = vpop.xlane.xlu0 %1436
        %v1438 = vsel %vm1386, %v1371, 0.0
        %1439 = vadd.xlane.f32.xlu0 %v1438
        %v1440 = vpop.xlane.xlu0 %1439
        %v1441 = vsel %vm1386, %v1372, 0.0
        %1442 = vadd.xlane.f32.xlu0 %v1441
        %v1443 = vpop.xlane.xlu0 %1442
        %v1444 = vsel %vm1386, %v1373, 0.0
        %1445 = vadd.xlane.f32.xlu0 %v1444
        %v1446 = vpop.xlane.xlu0 %1445
        %v1447 = vsel %vm1386, %v1374, 0.0
        %1448 = vadd.xlane.f32.xlu0 %v1447
        %v1449 = vpop.xlane.xlu0 %1448
        %v1450 = vsel %vm1386, %v1375, 0.0
        %1451 = vadd.xlane.f32.xlu0 %v1450
        %v1452 = vpop.xlane.xlu0 %1451
        %v1453 = vsel %vm1386, %v1376, 0.0
        %1454 = vadd.xlane.f32.xlu0 %v1453
        %v1455 = vpop.xlane.xlu0 %1454
        %v1456 = vsel %vm1386, %v1377, 0.0
        %1457 = vadd.xlane.f32.xlu0 %v1456
        %v1458 = vpop.xlane.xlu0 %1457
        %v1459 = vsel %vm1386, %v1378, 0.0
        %1460 = vadd.xlane.f32.xlu0 %v1459
        %v1461 = vpop.xlane.xlu0 %1460
        %v1462 = vsel %vm1386, %v1379, 0.0
        %1463 = vadd.xlane.f32.xlu0 %v1462
        %v1464 = vpop.xlane.xlu0 %1463
        %v1465 = vsel %vm1386, %v1380, 0.0
        %1466 = vadd.xlane.f32.xlu0 %v1465
        %v1467 = vpop.xlane.xlu0 %1466
        %v1468 = vsel %vm1386, %v1381, 0.0
        %1469 = vadd.xlane.f32.xlu0 %v1468
        %v1470 = vpop.xlane.xlu0 %1469
        %v1471 = vsel %vm1386, %v1382, 0.0
        %1472 = vadd.xlane.f32.xlu0 %v1471
        %v1473 = vpop.xlane.xlu0 %1472
        %v1474 = vsel %vm1386, %v1383, 0.0
        %1475 = vadd.xlane.f32.xlu0 %v1474
        %v1476 = vpop.xlane.xlu0 %1475
        %v1477 = vsel %vm1386, %v1384, 0.0
        %1478 = vadd.xlane.f32.xlu0 %v1477
        %v1479 = vpop.xlane.xlu0 %1478
        %v1480 = vsel %vm1386, %v1385, 0.0
        %1481 = vadd.xlane.f32.xlu0 %v1480
        %v1482 = vpop.xlane.xlu0 %1481
        %v1483 = vld [vmem:[#allocation2] sm:$0x1]
        %v1485 = vlaneseq
        %v1486 = vshrl.u32 %v1485, 7
        %v1487 = vsub.s32 0, %v1486
        %v1488 = vrot.slane %v1483, %v1487
        %1489 = vset.pattern.permute.xlu0 0
        %1490 = vperm.xlu0 %1489, %v1488
        %v1491 = vpop.permute.xlu0 %1490
        %v1493 = vadd.f32 %v1389, %v1491
        %v1494 = vadd.f32 %v1392, %v1491
        %v1495 = vadd.f32 %v1395, %v1491
        %v1496 = vadd.f32 %v1398, %v1491
        %v1497 = vadd.f32 %v1401, %v1491
        %v1498 = vadd.f32 %v1404, %v1491
        %v1499 = vadd.f32 %v1407, %v1491
        %v1500 = vadd.f32 %v1410, %v1491
        %v1501 = vadd.f32 %v1413, %v1491
        %v1502 = vadd.f32 %v1416, %v1491
        %v1503 = vadd.f32 %v1419, %v1491
        %v1504 = vadd.f32 %v1422, %v1491
        %v1505 = vadd.f32 %v1425, %v1491
        %v1506 = vadd.f32 %v1428, %v1491
        %v1507 = vadd.f32 %v1431, %v1491
        %v1508 = vadd.f32 %v1434, %v1491
        %v1509 = vadd.f32 %v1437, %v1491
        %v1510 = vadd.f32 %v1440, %v1491
        %v1511 = vadd.f32 %v1443, %v1491
        %v1512 = vadd.f32 %v1446, %v1491
        %v1513 = vadd.f32 %v1449, %v1491
        %v1514 = vadd.f32 %v1452, %v1491
        %v1515 = vadd.f32 %v1455, %v1491
        %v1516 = vadd.f32 %v1458, %v1491
        %v1517 = vadd.f32 %v1461, %v1491
        %v1518 = vadd.f32 %v1464, %v1491
        %v1519 = vadd.f32 %v1467, %v1491
        %v1520 = vadd.f32 %v1470, %v1491
        %v1521 = vadd.f32 %v1473, %v1491
        %v1522 = vadd.f32 %v1476, %v1491
        %v1523 = vadd.f32 %v1479, %v1491
        %v1524 = vadd.f32 %v1482, %v1491
        %v1557 = vlaneseq
        %v1558 = vand.u32 %v1557, 127
        %v1559 = vlaneseq
        %v1560 = vshrl.u32 %v1559, 7
        %v1561 = vsub.s32 %v1558, %v1560
        %v1562 = vrot.slane %v1493, %v1561
        %v1563 = vadd.s32 %v1558, 4294967288
        %v1564 = vlaneseq
        %v1565 = vshrl.u32 %v1564, 7
        %v1566 = vsub.s32 %v1563, %v1565
        %v1567 = vrot.slane %v1494, %v1566
        %vm1568 = vcmask 130112
        %v1569 = vsel %vm1568, %v1567, %v1562
        %v1570 = vadd.s32 %v1558, 4294967280
        %v1571 = vlaneseq
        %v1572 = vshrl.u32 %v1571, 7
        %v1573 = vsub.s32 %v1570, %v1572
        %v1574 = vrot.slane %v1495, %v1573
        %vm1575 = vcmask 195712
        %v1576 = vsel %vm1575, %v1574, %v1569
        %v1577 = vadd.s32 %v1558, 4294967272
        %v1578 = vlaneseq
        %v1579 = vshrl.u32 %v1578, 7
        %v1580 = vsub.s32 %v1577, %v1579
        %v1581 = vrot.slane %v1496, %v1580
        %vm1582 = vcmask 261312
        %v1583 = vsel %vm1582, %v1581, %v1576
        %v1584 = vadd.s32 %v1558, 4294967264
        %v1585 = vlaneseq
        %v1586 = vshrl.u32 %v1585, 7
        %v1587 = vsub.s32 %v1584, %v1586
        %v1588 = vrot.slane %v1497, %v1587
        %vm1589 = vcmask 326912
        %v1590 = vsel %vm1589, %v1588, %v1583
        %v1591 = vadd.s32 %v1558, 4294967256
        %v1592 = vlaneseq
        %v1593 = vshrl.u32 %v1592, 7
        %v1594 = vsub.s32 %v1591, %v1593
        %v1595 = vrot.slane %v1498, %v1594
        %vm1596 = vcmask 392512
        %v1597 = vsel %vm1596, %v1595, %v1590
        %v1598 = vadd.s32 %v1558, 4294967248
        %v1599 = vlaneseq
        %v1600 = vshrl.u32 %v1599, 7
        %v1601 = vsub.s32 %v1598, %v1600
        %v1602 = vrot.slane %v1499, %v1601
        %vm1603 = vcmask 458112
        %v1604 = vsel %vm1603, %v1602, %v1597
        %v1605 = vadd.s32 %v1558, 4294967240
        %v1606 = vlaneseq
        %v1607 = vshrl.u32 %v1606, 7
        %v1608 = vsub.s32 %v1605, %v1607
        %v1609 = vrot.slane %v1500, %v1608
        %vm1610 = vcmask 523712
        %v1611 = vsel %vm1610, %v1609, %v1604
        %v1612 = vadd.s32 %v1558, 4294967232
        %v1613 = vlaneseq
        %v1614 = vshrl.u32 %v1613, 7
        %v1615 = vsub.s32 %v1612, %v1614
        %v1616 = vrot.slane %v1501, %v1615
        %vm1617 = vcmask 589312
        %v1618 = vsel %vm1617, %v1616, %v1611
        %v1619 = vadd.s32 %v1558, 4294967224
        %v1620 = vlaneseq
        %v1621 = vshrl.u32 %v1620, 7
        %v1622 = vsub.s32 %v1619, %v1621
        %v1623 = vrot.slane %v1502, %v1622
        %vm1624 = vcmask 654912
        %v1625 = vsel %vm1624, %v1623, %v1618
        %v1626 = vadd.s32 %v1558, 4294967216
        %v1627 = vlaneseq
        %v1628 = vshrl.u32 %v1627, 7
        %v1629 = vsub.s32 %v1626, %v1628
        %v1630 = vrot.slane %v1503, %v1629
        %vm1631 = vcmask 720512
        %v1632 = vsel %vm1631, %v1630, %v1625
        %v1633 = vadd.s32 %v1558, 4294967208
        %v1634 = vlaneseq
        %v1635 = vshrl.u32 %v1634, 7
        %v1636 = vsub.s32 %v1633, %v1635
        %v1637 = vrot.slane %v1504, %v1636
        %vm1638 = vcmask 786112
        %v1639 = vsel %vm1638, %v1637, %v1632
        %v1640 = vadd.s32 %v1558, 4294967200
        %v1641 = vlaneseq
        %v1642 = vshrl.u32 %v1641, 7
        %v1643 = vsub.s32 %v1640, %v1642
        %v1644 = vrot.slane %v1505, %v1643
        %vm1645 = vcmask 851712
        %v1646 = vsel %vm1645, %v1644, %v1639
        %v1647 = vadd.s32 %v1558, 4294967192
        %v1648 = vlaneseq
        %v1649 = vshrl.u32 %v1648, 7
        %v1650 = vsub.s32 %v1647, %v1649
        %v1651 = vrot.slane %v1506, %v1650
        %vm1652 = vcmask 917312
        %v1653 = vsel %vm1652, %v1651, %v1646
        %v1654 = vadd.s32 %v1558, 4294967184
        %v1655 = vlaneseq
        %v1656 = vshrl.u32 %v1655, 7
        %v1657 = vsub.s32 %v1654, %v1656
        %v1658 = vrot.slane %v1507, %v1657
        %vm1659 = vcmask 982912
        %v1660 = vsel %vm1659, %v1658, %v1653
        %v1661 = vadd.s32 %v1558, 4294967176
        %v1662 = vlaneseq
        %v1663 = vshrl.u32 %v1662, 7
        %v1664 = vsub.s32 %v1661, %v1663
        %v1665 = vrot.slane %v1508, %v1664
        %vm1666 = vcmask 1048512
        %v1667 = vsel %vm1666, %v1665, %v1660
        %v1668 = vlaneseq
        %v1669 = vshrl.u32 %v1668, 7
        %v1670 = vsub.s32 %v1558, %v1669
        %v1671 = vrot.slane %v1509, %v1670
        %v1672 = vlaneseq
        %v1673 = vshrl.u32 %v1672, 7
        %v1674 = vsub.s32 %v1563, %v1673
        %v1675 = vrot.slane %v1510, %v1674
        %v1676 = vsel %vm1568, %v1675, %v1671
        %v1677 = vlaneseq
        %v1678 = vshrl.u32 %v1677, 7
        %v1679 = vsub.s32 %v1570, %v1678
        %v1680 = vrot.slane %v1511, %v1679
        %v1681 = vsel %vm1575, %v1680, %v1676
        %v1682 = vlaneseq
        %v1683 = vshrl.u32 %v1682, 7
        %v1684 = vsub.s32 %v1577, %v1683
        %v1685 = vrot.slane %v1512, %v1684
        %v1686 = vsel %vm1582, %v1685, %v1681
        %v1687 = vlaneseq
        %v1688 = vshrl.u32 %v1687, 7
        %v1689 = vsub.s32 %v1584, %v1688
        %v1690 = vrot.slane %v1513, %v1689
        %v1691 = vsel %vm1589, %v1690, %v1686
        %v1692 = vlaneseq
        %v1693 = vshrl.u32 %v1692, 7
        %v1694 = vsub.s32 %v1591, %v1693
        %v1695 = vrot.slane %v1514, %v1694
        %v1696 = vsel %vm1596, %v1695, %v1691
        %v1697 = vlaneseq
        %v1698 = vshrl.u32 %v1697, 7
        %v1699 = vsub.s32 %v1598, %v1698
        %v1700 = vrot.slane %v1515, %v1699
        %v1701 = vsel %vm1603, %v1700, %v1696
        %v1702 = vlaneseq
        %v1703 = vshrl.u32 %v1702, 7
        %v1704 = vsub.s32 %v1605, %v1703
        %v1705 = vrot.slane %v1516, %v1704
        %v1706 = vsel %vm1610, %v1705, %v1701
        %v1707 = vlaneseq
        %v1708 = vshrl.u32 %v1707, 7
        %v1709 = vsub.s32 %v1612, %v1708
        %v1710 = vrot.slane %v1517, %v1709
        %v1711 = vsel %vm1617, %v1710, %v1706
        %v1712 = vlaneseq
        %v1713 = vshrl.u32 %v1712, 7
        %v1714 = vsub.s32 %v1619, %v1713
        %v1715 = vrot.slane %v1518, %v1714
        %v1716 = vsel %vm1624, %v1715, %v1711
        %v1717 = vlaneseq
        %v1718 = vshrl.u32 %v1717, 7
        %v1719 = vsub.s32 %v1626, %v1718
        %v1720 = vrot.slane %v1519, %v1719
        %v1721 = vsel %vm1631, %v1720, %v1716
        %v1722 = vlaneseq
        %v1723 = vshrl.u32 %v1722, 7
        %v1724 = vsub.s32 %v1633, %v1723
        %v1725 = vrot.slane %v1520, %v1724
        %v1726 = vsel %vm1638, %v1725, %v1721
        %v1727 = vlaneseq
        %v1728 = vshrl.u32 %v1727, 7
        %v1729 = vsub.s32 %v1640, %v1728
        %v1730 = vrot.slane %v1521, %v1729
        %v1731 = vsel %vm1645, %v1730, %v1726
        %v1732 = vlaneseq
        %v1733 = vshrl.u32 %v1732, 7
        %v1734 = vsub.s32 %v1647, %v1733
        %v1735 = vrot.slane %v1522, %v1734
        %v1736 = vsel %vm1652, %v1735, %v1731
        %v1737 = vlaneseq
        %v1738 = vshrl.u32 %v1737, 7
        %v1739 = vsub.s32 %v1654, %v1738
        %v1740 = vrot.slane %v1523, %v1739
        %v1741 = vsel %vm1659, %v1740, %v1736
        %v1742 = vlaneseq
        %v1743 = vshrl.u32 %v1742, 7
        %v1744 = vsub.s32 %v1661, %v1743
        %v1745 = vrot.slane %v1524, %v1744
        %v1746 = vsel %vm1666, %v1745, %v1741
        %vm1747 = vcmask 1041409
        %v1748 = vsel %vm1747, %v1746, %v1667
        %vm1750 = vcmask 1041408
        %v1751 = vsel %vm1750, %v1748, -inf
        %1752 = vmax.xlane.f32.xlu0 %v1751
        %v1753 = vpop.xlane.xlu0 %1752
        %v1755 = vlaneseq
        %v1756 = vshrl.u32 %v1755, 7
        %v1757 = vsub.s32 0, %v1756
        %v1758 = vrot.slane %v1753, %v1757
        %v1759 = vlaneseq
        %v1760 = vshrl.u32 %v1759, 7
        %v1761 = vsub.s32 1, %v1760
        %v1762 = vrot.slane %v1753, %v1761
        %v1765 = vsub.f32 %v1493, %v1758
        %v1766 = vsub.f32 %v1494, %v1758
        %v1767 = vsub.f32 %v1495, %v1758
        %v1768 = vsub.f32 %v1496, %v1758
        %v1769 = vsub.f32 %v1497, %v1758
        %v1770 = vsub.f32 %v1498, %v1758
        %v1771 = vsub.f32 %v1499, %v1758
        %v1772 = vsub.f32 %v1500, %v1758
        %v1773 = vsub.f32 %v1501, %v1758
        %v1774 = vsub.f32 %v1502, %v1758
        %v1775 = vsub.f32 %v1503, %v1758
        %v1776 = vsub.f32 %v1504, %v1758
        %v1777 = vsub.f32 %v1505, %v1758
        %v1778 = vsub.f32 %v1506, %v1758
        %v1779 = vsub.f32 %v1507, %v1758
        %v1780 = vsub.f32 %v1508, %v1758
        %v1781 = vsub.f32 %v1509, %v1762
        %v1782 = vsub.f32 %v1510, %v1762
        %v1783 = vsub.f32 %v1511, %v1762
        %v1784 = vsub.f32 %v1512, %v1762
        %v1785 = vsub.f32 %v1513, %v1762
        %v1786 = vsub.f32 %v1514, %v1762
        %v1787 = vsub.f32 %v1515, %v1762
        %v1788 = vsub.f32 %v1516, %v1762
        %v1789 = vsub.f32 %v1517, %v1762
        %v1790 = vsub.f32 %v1518, %v1762
        %v1791 = vsub.f32 %v1519, %v1762
        %v1792 = vsub.f32 %v1520, %v1762
        %v1793 = vsub.f32 %v1521, %v1762
        %v1794 = vsub.f32 %v1522, %v1762
        %v1795 = vsub.f32 %v1523, %v1762
        %v1796 = vsub.f32 %v1524, %v1762
        %v1797 = vmul.f32 %v1765, 1.442695
        %v1798 = vpow.pop %v1797
        %v1799 = vmul.f32 %v1766, 1.442695
        %v1800 = vpow.pop %v1799
        %v1801 = vmul.f32 %v1767, 1.442695
        %v1802 = vpow.pop %v1801
        %v1803 = vmul.f32 %v1768, 1.442695
        %v1804 = vpow.pop %v1803
        %v1805 = vmul.f32 %v1769, 1.442695
        %v1806 = vpow.pop %v1805
        %v1807 = vmul.f32 %v1770, 1.442695
        %v1808 = vpow.pop %v1807
        %v1809 = vmul.f32 %v1771, 1.442695
        %v1810 = vpow.pop %v1809
        %v1811 = vmul.f32 %v1772, 1.442695
        %v1812 = vpow.pop %v1811
        %v1813 = vmul.f32 %v1773, 1.442695
        %v1814 = vpow.pop %v1813
        %v1815 = vmul.f32 %v1774, 1.442695
        %v1816 = vpow.pop %v1815
        %v1817 = vmul.f32 %v1775, 1.442695
        %v1818 = vpow.pop %v1817
        %v1819 = vmul.f32 %v1776, 1.442695
        %v1820 = vpow.pop %v1819
        %v1821 = vmul.f32 %v1777, 1.442695
        %v1822 = vpow.pop %v1821
        %v1823 = vmul.f32 %v1778, 1.442695
        %v1824 = vpow.pop %v1823
        %v1825 = vmul.f32 %v1779, 1.442695
        %v1826 = vpow.pop %v1825
        %v1827 = vmul.f32 %v1780, 1.442695
        %v1828 = vpow.pop %v1827
        %v1829 = vmul.f32 %v1781, 1.442695
        %v1830 = vpow.pop %v1829
        %v1831 = vmul.f32 %v1782, 1.442695
        %v1832 = vpow.pop %v1831
        %v1833 = vmul.f32 %v1783, 1.442695
        %v1834 = vpow.pop %v1833
        %v1835 = vmul.f32 %v1784, 1.442695
        %v1836 = vpow.pop %v1835
        %v1837 = vmul.f32 %v1785, 1.442695
        %v1838 = vpow.pop %v1837
        %v1839 = vmul.f32 %v1786, 1.442695
        %v1840 = vpow.pop %v1839
        %v1841 = vmul.f32 %v1787, 1.442695
        %v1842 = vpow.pop %v1841
        %v1843 = vmul.f32 %v1788, 1.442695
        %v1844 = vpow.pop %v1843
        %v1845 = vmul.f32 %v1789, 1.442695
        %v1846 = vpow.pop %v1845
        %v1847 = vmul.f32 %v1790, 1.442695
        %v1848 = vpow.pop %v1847
        %v1849 = vmul.f32 %v1791, 1.442695
        %v1850 = vpow.pop %v1849
        %v1851 = vmul.f32 %v1792, 1.442695
        %v1852 = vpow.pop %v1851
        %v1853 = vmul.f32 %v1793, 1.442695
        %v1854 = vpow.pop %v1853
        %v1855 = vmul.f32 %v1794, 1.442695
        %v1856 = vpow.pop %v1855
        %v1857 = vmul.f32 %v1795, 1.442695
        %v1858 = vpow.pop %v1857
        %v1859 = vmul.f32 %v1796, 1.442695
        %v1860 = vpow.pop %v1859
        %1893 = vset.pattern.permute.xlu0 0
        %1894 = vperm.xlu0 %1893, %v1798
        %v1895 = vpop.permute.xlu0 %1894
        %1896 = vset.pattern.permute.xlu0 0
        %1897 = vperm.xlu0 %1896, %v1800
        %v1898 = vpop.permute.xlu0 %1897
        %1899 = vset.pattern.permute.xlu0 0
        %1900 = vperm.xlu0 %1899, %v1802
        %v1901 = vpop.permute.xlu0 %1900
        %1902 = vset.pattern.permute.xlu0 0
        %1903 = vperm.xlu0 %1902, %v1804
        %v1904 = vpop.permute.xlu0 %1903
        %1905 = vset.pattern.permute.xlu0 0
        %1906 = vperm.xlu0 %1905, %v1806
        %v1907 = vpop.permute.xlu0 %1906
        %1908 = vset.pattern.permute.xlu0 0
        %1909 = vperm.xlu0 %1908, %v1808
        %v1910 = vpop.permute.xlu0 %1909
        %1911 = vset.pattern.permute.xlu0 0
        %1912 = vperm.xlu0 %1911, %v1810
        %v1913 = vpop.permute.xlu0 %1912
        %1914 = vset.pattern.permute.xlu0 0
        %1915 = vperm.xlu0 %1914, %v1812
        %v1916 = vpop.permute.xlu0 %1915
        %1917 = vset.pattern.permute.xlu0 0
        %1918 = vperm.xlu0 %1917, %v1814
        %v1919 = vpop.permute.xlu0 %1918
        %1920 = vset.pattern.permute.xlu0 0
        %1921 = vperm.xlu0 %1920, %v1816
        %v1922 = vpop.permute.xlu0 %1921
        %1923 = vset.pattern.permute.xlu0 0
        %1924 = vperm.xlu0 %1923, %v1818
        %v1925 = vpop.permute.xlu0 %1924
        %1926 = vset.pattern.permute.xlu0 0
        %1927 = vperm.xlu0 %1926, %v1820
        %v1928 = vpop.permute.xlu0 %1927
        %1929 = vset.pattern.permute.xlu0 0
        %1930 = vperm.xlu0 %1929, %v1822
        %v1931 = vpop.permute.xlu0 %1930
        %1932 = vset.pattern.permute.xlu0 0
        %1933 = vperm.xlu0 %1932, %v1824
        %v1934 = vpop.permute.xlu0 %1933
        %1935 = vset.pattern.permute.xlu0 0
        %1936 = vperm.xlu0 %1935, %v1826
        %v1937 = vpop.permute.xlu0 %1936
        %1938 = vset.pattern.permute.xlu0 0
        %1939 = vperm.xlu0 %1938, %v1828
        %v1940 = vpop.permute.xlu0 %1939
        %1941 = vset.pattern.permute.xlu0 0
        %1942 = vperm.xlu0 %1941, %v1830
        %v1943 = vpop.permute.xlu0 %1942
        %1944 = vset.pattern.permute.xlu0 0
        %1945 = vperm.xlu0 %1944, %v1832
        %v1946 = vpop.permute.xlu0 %1945
        %1947 = vset.pattern.permute.xlu0 0
        %1948 = vperm.xlu0 %1947, %v1834
        %v1949 = vpop.permute.xlu0 %1948
        %1950 = vset.pattern.permute.xlu0 0
        %1951 = vperm.xlu0 %1950, %v1836
        %v1952 = vpop.permute.xlu0 %1951
        %1953 = vset.pattern.permute.xlu0 0
        %1954 = vperm.xlu0 %1953, %v1838
        %v1955 = vpop.permute.xlu0 %1954
        %1956 = vset.pattern.permute.xlu0 0
        %1957 = vperm.xlu0 %1956, %v1840
        %v1958 = vpop.permute.xlu0 %1957
        %1959 = vset.pattern.permute.xlu0 0
        %1960 = vperm.xlu0 %1959, %v1842
        %v1961 = vpop.permute.xlu0 %1960
        %1962 = vset.pattern.permute.xlu0 0
        %1963 = vperm.xlu0 %1962, %v1844
        %v1964 = vpop.permute.xlu0 %1963
        %1965 = vset.pattern.permute.xlu0 0
        %1966 = vperm.xlu0 %1965, %v1846
        %v1967 = vpop.permute.xlu0 %1966
        %1968 = vset.pattern.permute.xlu0 0
        %1969 = vperm.xlu0 %1968, %v1848
        %v1970 = vpop.permute.xlu0 %1969
        %1971 = vset.pattern.permute.xlu0 0
        %1972 = vperm.xlu0 %1971, %v1850
        %v1973 = vpop.permute.xlu0 %1972
        %1974 = vset.pattern.permute.xlu0 0
        %1975 = vperm.xlu0 %1974, %v1852
        %v1976 = vpop.permute.xlu0 %1975
        %1977 = vset.pattern.permute.xlu0 0
        %1978 = vperm.xlu0 %1977, %v1854
        %v1979 = vpop.permute.xlu0 %1978
        %1980 = vset.pattern.permute.xlu0 0
        %1981 = vperm.xlu0 %1980, %v1856
        %v1982 = vpop.permute.xlu0 %1981
        %1983 = vset.pattern.permute.xlu0 0
        %1984 = vperm.xlu0 %1983, %v1858
        %v1985 = vpop.permute.xlu0 %1984
        %1986 = vset.pattern.permute.xlu0 0
        %1987 = vperm.xlu0 %1986, %v1860
        %v1988 = vpop.permute.xlu0 %1987
        %v1989 = vlaneseq
        %v1990 = vshrl.u32 %v1989, 7
        %v1991 = vsub.s32 %v1558, %v1990
        %v1992 = vrot.slane %v1895, %v1991
        %v1993 = vlaneseq
        %v1994 = vshrl.u32 %v1993, 7
        %v1995 = vsub.s32 %v1563, %v1994
        %v1996 = vrot.slane %v1898, %v1995
        %v1997 = vsel %vm1568, %v1996, %v1992
        %v1998 = vlaneseq
        %v1999 = vshrl.u32 %v1998, 7
        %v2000 = vsub.s32 %v1570, %v1999
        %v2001 = vrot.slane %v1901, %v2000
        %v2002 = vsel %vm1575, %v2001, %v1997
        %v2003 = vlaneseq
        %v2004 = vshrl.u32 %v2003, 7
        %v2005 = vsub.s32 %v1577, %v2004
        %v2006 = vrot.slane %v1904, %v2005
        %v2007 = vsel %vm1582, %v2006, %v2002
        %v2008 = vlaneseq
        %v2009 = vshrl.u32 %v2008, 7
        %v2010 = vsub.s32 %v1584, %v2009
        %v2011 = vrot.slane %v1907, %v2010
        %v2012 = vsel %vm1589, %v2011, %v2007
        %v2013 = vlaneseq
        %v2014 = vshrl.u32 %v2013, 7
        %v2015 = vsub.s32 %v1591, %v2014
        %v2016 = vrot.slane %v1910, %v2015
        %v2017 = vsel %vm1596, %v2016, %v2012
        %v2018 = vlaneseq
        %v2019 = vshrl.u32 %v2018, 7
        %v2020 = vsub.s32 %v1598, %v2019
        %v2021 = vrot.slane %v1913, %v2020
        %v2022 = vsel %vm1603, %v2021, %v2017
        %v2023 = vlaneseq
        %v2024 = vshrl.u32 %v2023, 7
        %v2025 = vsub.s32 %v1605, %v2024
        %v2026 = vrot.slane %v1916, %v2025
        %v2027 = vsel %vm1610, %v2026, %v2022
        %v2028 = vlaneseq
        %v2029 = vshrl.u32 %v2028, 7
        %v2030 = vsub.s32 %v1612, %v2029
        %v2031 = vrot.slane %v1919, %v2030
        %v2032 = vsel %vm1617, %v2031, %v2027
        %v2033 = vlaneseq
        %v2034 = vshrl.u32 %v2033, 7
        %v2035 = vsub.s32 %v1619, %v2034
        %v2036 = vrot.slane %v1922, %v2035
        %v2037 = vsel %vm1624, %v2036, %v2032
        %v2038 = vlaneseq
        %v2039 = vshrl.u32 %v2038, 7
        %v2040 = vsub.s32 %v1626, %v2039
        %v2041 = vrot.slane %v1925, %v2040
        %v2042 = vsel %vm1631, %v2041, %v2037
        %v2043 = vlaneseq
        %v2044 = vshrl.u32 %v2043, 7
        %v2045 = vsub.s32 %v1633, %v2044
        %v2046 = vrot.slane %v1928, %v2045
        %v2047 = vsel %vm1638, %v2046, %v2042
        %v2048 = vlaneseq
        %v2049 = vshrl.u32 %v2048, 7
        %v2050 = vsub.s32 %v1640, %v2049
        %v2051 = vrot.slane %v1931, %v2050
        %v2052 = vsel %vm1645, %v2051, %v2047
        %v2053 = vlaneseq
        %v2054 = vshrl.u32 %v2053, 7
        %v2055 = vsub.s32 %v1647, %v2054
        %v2056 = vrot.slane %v1934, %v2055
        %v2057 = vsel %vm1652, %v2056, %v2052
        %v2058 = vlaneseq
        %v2059 = vshrl.u32 %v2058, 7
        %v2060 = vsub.s32 %v1654, %v2059
        %v2061 = vrot.slane %v1937, %v2060
        %v2062 = vsel %vm1659, %v2061, %v2057
        %v2063 = vlaneseq
        %v2064 = vshrl.u32 %v2063, 7
        %v2065 = vsub.s32 %v1661, %v2064
        %v2066 = vrot.slane %v1940, %v2065
        %v2067 = vsel %vm1666, %v2066, %v2062
        %v2068 = vlaneseq
        %v2069 = vshrl.u32 %v2068, 7
        %v2070 = vsub.s32 %v1558, %v2069
        %v2071 = vrot.slane %v1943, %v2070
        %v2072 = vlaneseq
        %v2073 = vshrl.u32 %v2072, 7
        %v2074 = vsub.s32 %v1563, %v2073
        %v2075 = vrot.slane %v1946, %v2074
        %v2076 = vsel %vm1568, %v2075, %v2071
        %v2077 = vlaneseq
        %v2078 = vshrl.u32 %v2077, 7
        %v2079 = vsub.s32 %v1570, %v2078
        %v2080 = vrot.slane %v1949, %v2079
        %v2081 = vsel %vm1575, %v2080, %v2076
        %v2082 = vlaneseq
        %v2083 = vshrl.u32 %v2082, 7
        %v2084 = vsub.s32 %v1577, %v2083
        %v2085 = vrot.slane %v1952, %v2084
        %v2086 = vsel %vm1582, %v2085, %v2081
        %v2087 = vlaneseq
        %v2088 = vshrl.u32 %v2087, 7
        %v2089 = vsub.s32 %v1584, %v2088
        %v2090 = vrot.slane %v1955, %v2089
        %v2091 = vsel %vm1589, %v2090, %v2086
        %v2092 = vlaneseq
        %v2093 = vshrl.u32 %v2092, 7
        %v2094 = vsub.s32 %v1591, %v2093
        %v2095 = vrot.slane %v1958, %v2094
        %v2096 = vsel %vm1596, %v2095, %v2091
        %v2097 = vlaneseq
        %v2098 = vshrl.u32 %v2097, 7
        %v2099 = vsub.s32 %v1598, %v2098
        %v2100 = vrot.slane %v1961, %v2099
        %v2101 = vsel %vm1603, %v2100, %v2096
        %v2102 = vlaneseq
        %v2103 = vshrl.u32 %v2102, 7
        %v2104 = vsub.s32 %v1605, %v2103
        %v2105 = vrot.slane %v1964, %v2104
        %v2106 = vsel %vm1610, %v2105, %v2101
        %v2107 = vlaneseq
        %v2108 = vshrl.u32 %v2107, 7
        %v2109 = vsub.s32 %v1612, %v2108
        %v2110 = vrot.slane %v1967, %v2109
        %v2111 = vsel %vm1617, %v2110, %v2106
        %v2112 = vlaneseq
        %v2113 = vshrl.u32 %v2112, 7
        %v2114 = vsub.s32 %v1619, %v2113
        %v2115 = vrot.slane %v1970, %v2114
        %v2116 = vsel %vm1624, %v2115, %v2111
        %v2117 = vlaneseq
        %v2118 = vshrl.u32 %v2117, 7
        %v2119 = vsub.s32 %v1626, %v2118
        %v2120 = vrot.slane %v1973, %v2119
        %v2121 = vsel %vm1631, %v2120, %v2116
        %v2122 = vlaneseq
        %v2123 = vshrl.u32 %v2122, 7
        %v2124 = vsub.s32 %v1633, %v2123
        %v2125 = vrot.slane %v1976, %v2124
        %v2126 = vsel %vm1638, %v2125, %v2121
        %v2127 = vlaneseq
        %v2128 = vshrl.u32 %v2127, 7
        %v2129 = vsub.s32 %v1640, %v2128
        %v2130 = vrot.slane %v1979, %v2129
        %v2131 = vsel %vm1645, %v2130, %v2126
        %v2132 = vlaneseq
        %v2133 = vshrl.u32 %v2132, 7
        %v2134 = vsub.s32 %v1647, %v2133
        %v2135 = vrot.slane %v1982, %v2134
        %v2136 = vsel %vm1652, %v2135, %v2131
        %v2137 = vlaneseq
        %v2138 = vshrl.u32 %v2137, 7
        %v2139 = vsub.s32 %v1654, %v2138
        %v2140 = vrot.slane %v1985, %v2139
        %v2141 = vsel %vm1659, %v2140, %v2136
        %v2142 = vlaneseq
        %v2143 = vshrl.u32 %v2142, 7
        %v2144 = vsub.s32 %v1661, %v2143
        %v2145 = vrot.slane %v1988, %v2144
        %v2146 = vsel %vm1666, %v2145, %v2141
        %v2147 = vsel %vm1747, %v2146, %v2067
        %v2149 = vsel %vm1750, %v2147, 0.0
        %2150 = vadd.xlane.f32.xlu0 %v2149
        %v2151 = vpop.xlane.xlu0 %2150
        %v2152 = vrcp.pop %v2151
        %v2154 = vlaneseq
        %v2155 = vshrl.u32 %v2154, 7
        %v2156 = vsub.s32 0, %v2155
        %v2157 = vrot.slane %v2152, %v2156
        %v2158 = vlaneseq
        %v2159 = vshrl.u32 %v2158, 7
        %v2160 = vsub.s32 1, %v2159
        %v2161 = vrot.slane %v2152, %v2160
        %v2164 = vmul.f32 %v1798, %v2157
        %v2165 = vmul.f32 %v1800, %v2157
        %v2166 = vmul.f32 %v1802, %v2157
        %v2167 = vmul.f32 %v1804, %v2157
        %v2168 = vmul.f32 %v1806, %v2157
        %v2169 = vmul.f32 %v1808, %v2157
        %v2170 = vmul.f32 %v1810, %v2157
        %v2171 = vmul.f32 %v1812, %v2157
        %v2172 = vmul.f32 %v1814, %v2157
        %v2173 = vmul.f32 %v1816, %v2157
        %v2174 = vmul.f32 %v1818, %v2157
        %v2175 = vmul.f32 %v1820, %v2157
        %v2176 = vmul.f32 %v1822, %v2157
        %v2177 = vmul.f32 %v1824, %v2157
        %v2178 = vmul.f32 %v1826, %v2157
        %v2179 = vmul.f32 %v1828, %v2157
        %v2180 = vmul.f32 %v1830, %v2161
        %v2181 = vmul.f32 %v1832, %v2161
        %v2182 = vmul.f32 %v1834, %v2161
        %v2183 = vmul.f32 %v1836, %v2161
        %v2184 = vmul.f32 %v1838, %v2161
        %v2185 = vmul.f32 %v1840, %v2161
        %v2186 = vmul.f32 %v1842, %v2161
        %v2187 = vmul.f32 %v1844, %v2161
        %v2188 = vmul.f32 %v1846, %v2161
        %v2189 = vmul.f32 %v1848, %v2161
        %v2190 = vmul.f32 %v1850, %v2161
        %v2191 = vmul.f32 %v1852, %v2161
        %v2192 = vmul.f32 %v1854, %v2161
        %v2193 = vmul.f32 %v1856, %v2161
        %v2194 = vmul.f32 %v1858, %v2161
        %v2195 = vmul.f32 %v1860, %v2161
        %2228 = vset.pattern.permute.xlu0 0
        %2229 = vperm.xlu0 %2228, %v2164
        %v2230 = vpop.permute.xlu0 %2229
        %2231 = vset.pattern.permute.xlu0 0
        %2232 = vperm.xlu0 %2231, %v2165
        %v2233 = vpop.permute.xlu0 %2232
        %2234 = vset.pattern.permute.xlu0 0
        %2235 = vperm.xlu0 %2234, %v2166
        %v2236 = vpop.permute.xlu0 %2235
        %2237 = vset.pattern.permute.xlu0 0
        %2238 = vperm.xlu0 %2237, %v2167
        %v2239 = vpop.permute.xlu0 %2238
        %2240 = vset.pattern.permute.xlu0 0
        %2241 = vperm.xlu0 %2240, %v2168
        %v2242 = vpop.permute.xlu0 %2241
        %2243 = vset.pattern.permute.xlu0 0
        %2244 = vperm.xlu0 %2243, %v2169
        %v2245 = vpop.permute.xlu0 %2244
        %2246 = vset.pattern.permute.xlu0 0
        %2247 = vperm.xlu0 %2246, %v2170
        %v2248 = vpop.permute.xlu0 %2247
        %2249 = vset.pattern.permute.xlu0 0
        %2250 = vperm.xlu0 %2249, %v2171
        %v2251 = vpop.permute.xlu0 %2250
        %2252 = vset.pattern.permute.xlu0 0
        %2253 = vperm.xlu0 %2252, %v2172
        %v2254 = vpop.permute.xlu0 %2253
        %2255 = vset.pattern.permute.xlu0 0
        %2256 = vperm.xlu0 %2255, %v2173
        %v2257 = vpop.permute.xlu0 %2256
        %2258 = vset.pattern.permute.xlu0 0
        %2259 = vperm.xlu0 %2258, %v2174
        %v2260 = vpop.permute.xlu0 %2259
        %2261 = vset.pattern.permute.xlu0 0
        %2262 = vperm.xlu0 %2261, %v2175
        %v2263 = vpop.permute.xlu0 %2262
        %2264 = vset.pattern.permute.xlu0 0
        %2265 = vperm.xlu0 %2264, %v2176
        %v2266 = vpop.permute.xlu0 %2265
        %2267 = vset.pattern.permute.xlu0 0
        %2268 = vperm.xlu0 %2267, %v2177
        %v2269 = vpop.permute.xlu0 %2268
        %2270 = vset.pattern.permute.xlu0 0
        %2271 = vperm.xlu0 %2270, %v2178
        %v2272 = vpop.permute.xlu0 %2271
        %2273 = vset.pattern.permute.xlu0 0
        %2274 = vperm.xlu0 %2273, %v2179
        %v2275 = vpop.permute.xlu0 %2274
        %2276 = vset.pattern.permute.xlu0 0
        %2277 = vperm.xlu0 %2276, %v2180
        %v2278 = vpop.permute.xlu0 %2277
        %2279 = vset.pattern.permute.xlu0 0
        %2280 = vperm.xlu0 %2279, %v2181
        %v2281 = vpop.permute.xlu0 %2280
        %2282 = vset.pattern.permute.xlu0 0
        %2283 = vperm.xlu0 %2282, %v2182
        %v2284 = vpop.permute.xlu0 %2283
        %2285 = vset.pattern.permute.xlu0 0
        %2286 = vperm.xlu0 %2285, %v2183
        %v2287 = vpop.permute.xlu0 %2286
        %2288 = vset.pattern.permute.xlu0 0
        %2289 = vperm.xlu0 %2288, %v2184
        %v2290 = vpop.permute.xlu0 %2289
        %2291 = vset.pattern.permute.xlu0 0
        %2292 = vperm.xlu0 %2291, %v2185
        %v2293 = vpop.permute.xlu0 %2292
        %2294 = vset.pattern.permute.xlu0 0
        %2295 = vperm.xlu0 %2294, %v2186
        %v2296 = vpop.permute.xlu0 %2295
        %2297 = vset.pattern.permute.xlu0 0
        %2298 = vperm.xlu0 %2297, %v2187
        %v2299 = vpop.permute.xlu0 %2298
        %2300 = vset.pattern.permute.xlu0 0
        %2301 = vperm.xlu0 %2300, %v2188
        %v2302 = vpop.permute.xlu0 %2301
        %2303 = vset.pattern.permute.xlu0 0
        %2304 = vperm.xlu0 %2303, %v2189
        %v2305 = vpop.permute.xlu0 %2304
        %2306 = vset.pattern.permute.xlu0 0
        %2307 = vperm.xlu0 %2306, %v2190
        %v2308 = vpop.permute.xlu0 %2307
        %2309 = vset.pattern.permute.xlu0 0
        %2310 = vperm.xlu0 %2309, %v2191
        %v2311 = vpop.permute.xlu0 %2310
        %2312 = vset.pattern.permute.xlu0 0
        %2313 = vperm.xlu0 %2312, %v2192
        %v2314 = vpop.permute.xlu0 %2313
        %2315 = vset.pattern.permute.xlu0 0
        %2316 = vperm.xlu0 %2315, %v2193
        %v2317 = vpop.permute.xlu0 %2316
        %2318 = vset.pattern.permute.xlu0 0
        %2319 = vperm.xlu0 %2318, %v2194
        %v2320 = vpop.permute.xlu0 %2319
        %2321 = vset.pattern.permute.xlu0 0
        %2322 = vperm.xlu0 %2321, %v2195
        %v2323 = vpop.permute.xlu0 %2322
        %v2324 = vlaneseq
        %v2325 = vshrl.u32 %v2324, 7
        %v2326 = vsub.s32 %v1558, %v2325
        %v2327 = vrot.slane %v2230, %v2326
        %v2328 = vlaneseq
        %v2329 = vshrl.u32 %v2328, 7
        %v2330 = vsub.s32 %v1563, %v2329
        %v2331 = vrot.slane %v2233, %v2330
        %v2332 = vsel %vm1568, %v2331, %v2327
        %v2333 = vlaneseq
        %v2334 = vshrl.u32 %v2333, 7
        %v2335 = vsub.s32 %v1570, %v2334
        %v2336 = vrot.slane %v2236, %v2335
        %v2337 = vsel %vm1575, %v2336, %v2332
        %v2338 = vlaneseq
        %v2339 = vshrl.u32 %v2338, 7
        %v2340 = vsub.s32 %v1577, %v2339
        %v2341 = vrot.slane %v2239, %v2340
        %v2342 = vsel %vm1582, %v2341, %v2337
        %v2343 = vlaneseq
        %v2344 = vshrl.u32 %v2343, 7
        %v2345 = vsub.s32 %v1584, %v2344
        %v2346 = vrot.slane %v2242, %v2345
        %v2347 = vsel %vm1589, %v2346, %v2342
        %v2348 = vlaneseq
        %v2349 = vshrl.u32 %v2348, 7
        %v2350 = vsub.s32 %v1591, %v2349
        %v2351 = vrot.slane %v2245, %v2350
        %v2352 = vsel %vm1596, %v2351, %v2347
        %v2353 = vlaneseq
        %v2354 = vshrl.u32 %v2353, 7
        %v2355 = vsub.s32 %v1598, %v2354
        %v2356 = vrot.slane %v2248, %v2355
        %v2357 = vsel %vm1603, %v2356, %v2352
        %v2358 = vlaneseq
        %v2359 = vshrl.u32 %v2358, 7
        %v2360 = vsub.s32 %v1605, %v2359
        %v2361 = vrot.slane %v2251, %v2360
        %v2362 = vsel %vm1610, %v2361, %v2357
        %v2363 = vlaneseq
        %v2364 = vshrl.u32 %v2363, 7
        %v2365 = vsub.s32 %v1612, %v2364
        %v2366 = vrot.slane %v2254, %v2365
        %v2367 = vsel %vm1617, %v2366, %v2362
        %v2368 = vlaneseq
        %v2369 = vshrl.u32 %v2368, 7
        %v2370 = vsub.s32 %v1619, %v2369
        %v2371 = vrot.slane %v2257, %v2370
        %v2372 = vsel %vm1624, %v2371, %v2367
        %v2373 = vlaneseq
        %v2374 = vshrl.u32 %v2373, 7
        %v2375 = vsub.s32 %v1626, %v2374
        %v2376 = vrot.slane %v2260, %v2375
        %v2377 = vsel %vm1631, %v2376, %v2372
        %v2378 = vlaneseq
        %v2379 = vshrl.u32 %v2378, 7
        %v2380 = vsub.s32 %v1633, %v2379
        %v2381 = vrot.slane %v2263, %v2380
        %v2382 = vsel %vm1638, %v2381, %v2377
        %v2383 = vlaneseq
        %v2384 = vshrl.u32 %v2383, 7
        %v2385 = vsub.s32 %v1640, %v2384
        %v2386 = vrot.slane %v2266, %v2385
        %v2387 = vsel %vm1645, %v2386, %v2382
        %v2388 = vlaneseq
        %v2389 = vshrl.u32 %v2388, 7
        %v2390 = vsub.s32 %v1647, %v2389
        %v2391 = vrot.slane %v2269, %v2390
        %v2392 = vsel %vm1652, %v2391, %v2387
        %v2393 = vlaneseq
        %v2394 = vshrl.u32 %v2393, 7
        %v2395 = vsub.s32 %v1654, %v2394
        %v2396 = vrot.slane %v2272, %v2395
        %v2397 = vsel %vm1659, %v2396, %v2392
        %v2398 = vlaneseq
        %v2399 = vshrl.u32 %v2398, 7
        %v2400 = vsub.s32 %v1661, %v2399
        %v2401 = vrot.slane %v2275, %v2400
        %v2402 = vsel %vm1666, %v2401, %v2397
        %v2403 = vlaneseq
        %v2404 = vshrl.u32 %v2403, 7
        %v2405 = vsub.s32 %v1558, %v2404
        %v2406 = vrot.slane %v2278, %v2405
        %v2407 = vlaneseq
        %v2408 = vshrl.u32 %v2407, 7
        %v2409 = vsub.s32 %v1563, %v2408
        %v2410 = vrot.slane %v2281, %v2409
        %v2411 = vsel %vm1568, %v2410, %v2406
        %v2412 = vlaneseq
        %v2413 = vshrl.u32 %v2412, 7
        %v2414 = vsub.s32 %v1570, %v2413
        %v2415 = vrot.slane %v2284, %v2414
        %v2416 = vsel %vm1575, %v2415, %v2411
        %v2417 = vlaneseq
        %v2418 = vshrl.u32 %v2417, 7
        %v2419 = vsub.s32 %v1577, %v2418
        %v2420 = vrot.slane %v2287, %v2419
        %v2421 = vsel %vm1582, %v2420, %v2416
        %v2422 = vlaneseq
        %v2423 = vshrl.u32 %v2422, 7
        %v2424 = vsub.s32 %v1584, %v2423
        %v2425 = vrot.slane %v2290, %v2424
        %v2426 = vsel %vm1589, %v2425, %v2421
        %v2427 = vlaneseq
        %v2428 = vshrl.u32 %v2427, 7
        %v2429 = vsub.s32 %v1591, %v2428
        %v2430 = vrot.slane %v2293, %v2429
        %v2431 = vsel %vm1596, %v2430, %v2426
        %v2432 = vlaneseq
        %v2433 = vshrl.u32 %v2432, 7
        %v2434 = vsub.s32 %v1598, %v2433
        %v2435 = vrot.slane %v2296, %v2434
        %v2436 = vsel %vm1603, %v2435, %v2431
        %v2437 = vlaneseq
        %v2438 = vshrl.u32 %v2437, 7
        %v2439 = vsub.s32 %v1605, %v2438
        %v2440 = vrot.slane %v2299, %v2439
        %v2441 = vsel %vm1610, %v2440, %v2436
        %v2442 = vlaneseq
        %v2443 = vshrl.u32 %v2442, 7
        %v2444 = vsub.s32 %v1612, %v2443
        %v2445 = vrot.slane %v2302, %v2444
        %v2446 = vsel %vm1617, %v2445, %v2441
        %v2447 = vlaneseq
        %v2448 = vshrl.u32 %v2447, 7
        %v2449 = vsub.s32 %v1619, %v2448
        %v2450 = vrot.slane %v2305, %v2449
        %v2451 = vsel %vm1624, %v2450, %v2446
        %v2452 = vlaneseq
        %v2453 = vshrl.u32 %v2452, 7
        %v2454 = vsub.s32 %v1626, %v2453
        %v2455 = vrot.slane %v2308, %v2454
        %v2456 = vsel %vm1631, %v2455, %v2451
        %v2457 = vlaneseq
        %v2458 = vshrl.u32 %v2457, 7
        %v2459 = vsub.s32 %v1633, %v2458
        %v2460 = vrot.slane %v2311, %v2459
        %v2461 = vsel %vm1638, %v2460, %v2456
        %v2462 = vlaneseq
        %v2463 = vshrl.u32 %v2462, 7
        %v2464 = vsub.s32 %v1640, %v2463
        %v2465 = vrot.slane %v2314, %v2464
        %v2466 = vsel %vm1645, %v2465, %v2461
        %v2467 = vlaneseq
        %v2468 = vshrl.u32 %v2467, 7
        %v2469 = vsub.s32 %v1647, %v2468
        %v2470 = vrot.slane %v2317, %v2469
        %v2471 = vsel %vm1652, %v2470, %v2466
        %v2472 = vlaneseq
        %v2473 = vshrl.u32 %v2472, 7
        %v2474 = vsub.s32 %v1654, %v2473
        %v2475 = vrot.slane %v2320, %v2474
        %v2476 = vsel %vm1659, %v2475, %v2471
        %v2477 = vlaneseq
        %v2478 = vshrl.u32 %v2477, 7
        %v2479 = vsub.s32 %v1661, %v2478
        %v2480 = vrot.slane %v2323, %v2479
        %v2481 = vsel %vm1666, %v2480, %v2476
        %2484 = vst [vmem:[%s377] sm:$0x1] %v2402
        %2485 = vst [vmem:[%s377 + $0x1] sm:$0x1] %v2481
        %v2486 = vld [vmem:[%s397] sm:$0xff]
        %v2487 = vld [vmem:[%s397 + $0x8] sm:$0xff]
        %v2488 = vld [vmem:[%s397 + $0x10] sm:$0xff]
        %v2489 = vld [vmem:[%s397 + $0x18] sm:$0xff]
        %v2490 = vld [vmem:[%s397 + $0x20] sm:$0xff]
        %v2491 = vld [vmem:[%s397 + $0x28] sm:$0xff]
        %v2492 = vld [vmem:[%s397 + $0x30] sm:$0xff]
        %v2493 = vld [vmem:[%s397 + $0x38] sm:$0xff]
        %v2494 = vld [vmem:[%s397 + $0x40] sm:$0xff]
        %v2495 = vld [vmem:[%s397 + $0x48] sm:$0xff]
        %v2496 = vld [vmem:[%s397 + $0x50] sm:$0xff]
        %v2497 = vld [vmem:[%s397 + $0x58] sm:$0xff]
        %v2498 = vld [vmem:[%s397 + $0x60] sm:$0xff]
        %v2499 = vld [vmem:[%s397 + $0x68] sm:$0xff]
        %v2500 = vld [vmem:[%s397 + $0x70] sm:$0xff]
        %v2501 = vld [vmem:[%s397 + $0x78] sm:$0xff]
        %v2502 = vld [vmem:[%s397 + $0x80] sm:$0xff]
        %v2503 = vld [vmem:[%s397 + $0x88] sm:$0xff]
        %v2504 = vld [vmem:[%s397 + $0x90] sm:$0xff]
        %v2505 = vld [vmem:[%s397 + $0x98] sm:$0xff]
        %v2506 = vld [vmem:[%s397 + $0xa0] sm:$0xff]
        %v2507 = vld [vmem:[%s397 + $0xa8] sm:$0xff]
        %v2508 = vld [vmem:[%s397 + $0xb0] sm:$0xff]
        %v2509 = vld [vmem:[%s397 + $0xb8] sm:$0xff]
        %v2510 = vld [vmem:[%s397 + $0xc0] sm:$0xff]
        %v2511 = vld [vmem:[%s397 + $0xc8] sm:$0xff]
        %v2512 = vld [vmem:[%s397 + $0xd0] sm:$0xff]
        %v2513 = vld [vmem:[%s397 + $0xd8] sm:$0xff]
        %v2514 = vld [vmem:[%s397 + $0xe0] sm:$0xff]
        %v2515 = vld [vmem:[%s397 + $0xe8] sm:$0xff]
        %v2516 = vld [vmem:[%s397 + $0xf0] sm:$0xff]
        %v2517 = vld [vmem:[%s397 + $0xf8] sm:$0xff]
        %v2550 = vmul.f32 %v2230, %v2486
        %v2551 = vmul.f32 %v2233, %v2487
        %v2552 = vmul.f32 %v2236, %v2488
        %v2553 = vmul.f32 %v2239, %v2489
        %v2554 = vmul.f32 %v2242, %v2490
        %v2555 = vmul.f32 %v2245, %v2491
        %v2556 = vmul.f32 %v2248, %v2492
        %v2557 = vmul.f32 %v2251, %v2493
        %v2558 = vmul.f32 %v2254, %v2494
        %v2559 = vmul.f32 %v2257, %v2495
        %v2560 = vmul.f32 %v2260, %v2496
        %v2561 = vmul.f32 %v2263, %v2497
        %v2562 = vmul.f32 %v2266, %v2498
        %v2563 = vmul.f32 %v2269, %v2499
        %v2564 = vmul.f32 %v2272, %v2500
        %v2565 = vmul.f32 %v2275, %v2501
        %v2566 = vmul.f32 %v2278, %v2502
        %v2567 = vmul.f32 %v2281, %v2503
        %v2568 = vmul.f32 %v2284, %v2504
        %v2569 = vmul.f32 %v2287, %v2505
        %v2570 = vmul.f32 %v2290, %v2506
        %v2571 = vmul.f32 %v2293, %v2507
        %v2572 = vmul.f32 %v2296, %v2508
        %v2573 = vmul.f32 %v2299, %v2509
        %v2574 = vmul.f32 %v2302, %v2510
        %v2575 = vmul.f32 %v2305, %v2511
        %v2576 = vmul.f32 %v2308, %v2512
        %v2577 = vmul.f32 %v2311, %v2513
        %v2578 = vmul.f32 %v2314, %v2514
        %v2579 = vmul.f32 %v2317, %v2515
        %v2580 = vmul.f32 %v2320, %v2516
        %v2581 = vmul.f32 %v2323, %v2517
        %v2582 = vsel %vm1386, %v2550, 0.0
        %v2583 = vsel %vm1386, %v2551, 0.0
        %v2584 = vadd.f32 %v2582, %v2583
        %v2585 = vsel %vm1386, %v2552, 0.0
        %v2586 = vadd.f32 %v2584, %v2585
        %v2587 = vsel %vm1386, %v2553, 0.0
        %v2588 = vadd.f32 %v2586, %v2587
        %v2589 = vsel %vm1386, %v2554, 0.0
        %v2590 = vadd.f32 %v2588, %v2589
        %v2591 = vsel %vm1386, %v2555, 0.0
        %v2592 = vadd.f32 %v2590, %v2591
        %v2593 = vsel %vm1386, %v2556, 0.0
        %v2594 = vadd.f32 %v2592, %v2593
        %v2595 = vsel %vm1386, %v2557, 0.0
        %v2596 = vadd.f32 %v2594, %v2595
        %v2597 = vsel %vm1386, %v2558, 0.0
        %v2598 = vadd.f32 %v2596, %v2597
        %v2599 = vsel %vm1386, %v2559, 0.0
        %v2600 = vadd.f32 %v2598, %v2599
        %v2601 = vsel %vm1386, %v2560, 0.0
        %v2602 = vadd.f32 %v2600, %v2601
        %v2603 = vsel %vm1386, %v2561, 0.0
        %v2604 = vadd.f32 %v2602, %v2603
        %v2605 = vsel %vm1386, %v2562, 0.0
        %v2606 = vadd.f32 %v2604, %v2605
        %v2607 = vsel %vm1386, %v2563, 0.0
        %v2608 = vadd.f32 %v2606, %v2607
        %v2609 = vsel %vm1386, %v2564, 0.0
        %v2610 = vadd.f32 %v2608, %v2609
        %v2611 = vsel %vm1386, %v2565, 0.0
        %v2612 = vadd.f32 %v2610, %v2611
        %v2613 = vrot.slane %v2612, 4
        %v2614 = vadd.f32 %v2612, %v2613
        %v2615 = vrot.slane %v2614, 2
        %v2616 = vadd.f32 %v2614, %v2615
        %v2617 = vrot.slane %v2616, 1
        %v2618 = vadd.f32 %v2616, %v2617
        %v2619 = vsel %vm1386, %v2566, 0.0
        %v2620 = vsel %vm1386, %v2567, 0.0
        %v2621 = vadd.f32 %v2619, %v2620
        %v2622 = vsel %vm1386, %v2568, 0.0
        %v2623 = vadd.f32 %v2621, %v2622
        %v2624 = vsel %vm1386, %v2569, 0.0
        %v2625 = vadd.f32 %v2623, %v2624
        %v2626 = vsel %vm1386, %v2570, 0.0
        %v2627 = vadd.f32 %v2625, %v2626
        %v2628 = vsel %vm1386, %v2571, 0.0
        %v2629 = vadd.f32 %v2627, %v2628
        %v2630 = vsel %vm1386, %v2572, 0.0
        %v2631 = vadd.f32 %v2629, %v2630
        %v2632 = vsel %vm1386, %v2573, 0.0
        %v2633 = vadd.f32 %v2631, %v2632
        %v2634 = vsel %vm1386, %v2574, 0.0
        %v2635 = vadd.f32 %v2633, %v2634
        %v2636 = vsel %vm1386, %v2575, 0.0
        %v2637 = vadd.f32 %v2635, %v2636
        %v2638 = vsel %vm1386, %v2576, 0.0
        %v2639 = vadd.f32 %v2637, %v2638
        %v2640 = vsel %vm1386, %v2577, 0.0
        %v2641 = vadd.f32 %v2639, %v2640
        %v2642 = vsel %vm1386, %v2578, 0.0
        %v2643 = vadd.f32 %v2641, %v2642
        %v2644 = vsel %vm1386, %v2579, 0.0
        %v2645 = vadd.f32 %v2643, %v2644
        %v2646 = vsel %vm1386, %v2580, 0.0
        %v2647 = vadd.f32 %v2645, %v2646
        %v2648 = vsel %vm1386, %v2581, 0.0
        %v2649 = vadd.f32 %v2647, %v2648
        %v2650 = vrot.slane %v2649, 4
        %v2651 = vadd.f32 %v2649, %v2650
        %v2652 = vrot.slane %v2651, 2
        %v2653 = vadd.f32 %v2651, %v2652
        %v2654 = vrot.slane %v2653, 1
        %v2655 = vadd.f32 %v2653, %v2654
        %vm2656 = vcmask 385024
        %2657 = vst.msk [vmem:[%s370] sm:$0x1] %vm2656, %v2618
        %2658 = vst.msk [vmem:[%s370 + $0x1] sm:$0x1] %vm2656, %v2655
        %s2659 = sand.u32 %s220, 1
        %s2660 = scalar_lea.sflag [#allocation4], %s2659
        %s2661 = sand.u32 %s220, 1
        %s2662 = smul.addr %s2661, 2
        %s2663 = scalar_lea.vmem [#allocation3], %s2662
        %s2664 = sand.u32 %s246, 1
        %s2665 = scalar_lea.sflag [#allocation6], %s2664
        %s2666 = sand.u32 %s246, 1
        %s2667 = smul.addr %s2666, 2
        %s2668 = scalar_lea.vmem [#allocation5], %s2667
        // Predicated region
        $region53: #{tpu_custom_call.1} parent=51 // pred_check
          %p2669 = pneg %p230
        $region54: #{tpu_custom_call.1} parent=51 // pred_check_branch
          %2671 = sbr.rel (%p2669) target = $region56
        $region55: #{tpu_custom_call.1} parent=51 // pred_region
          %s2672 = smul.u32 2, %s29
          %s2674 = ssub.s32 32, 32
          %2675 = vsyncadd %s2660, %s2674
          %s2676 = smul.addr %s2672, 16
          %s2677 = scalar_lea.hbm %s8, %s2676
          %s2678 = sshll.u32 %s2663, 4
          %s2679 = int_to_ptr.vmem [resolvable:$true] %s2678
          %2684 = dma.vmem_to_hbm [thread:$0]  %s2679, 32, %s2677, %s2660, 16, 16, 1
        $region56: #{tpu_custom_call.1} parent=51 // pred_fallthru
          _
        // Predicated region
        $region57: #{tpu_custom_call.1} parent=51 // pred_check
          %p2685 = pneg %p256
        $region58: #{tpu_custom_call.1} parent=51 // pred_check_branch
          %2687 = sbr.rel (%p2685) target = $region60
        $region59: #{tpu_custom_call.1} parent=51 // pred_region
          %s2688 = smul.u32 2, %s29
          %s2690 = ssub.s32 32, 32
          %2691 = vsyncadd %s2665, %s2690
          %s2692 = smul.addr %s2688, 16
          %s2693 = scalar_lea.hbm %s9, %s2692
          %s2694 = sshll.u32 %s2668, 4
          %s2695 = int_to_ptr.vmem [resolvable:$true] %s2694
          %2700 = dma.vmem_to_hbm [thread:$0]  %s2695, 32, %s2693, %s2665, 16, 16, 1
        $region60: #{tpu_custom_call.1} parent=51 // pred_fallthru
          _
      $region52: #{tpu_custom_call.1} parent=5 // pred_fallthru
        _
      %p2701 = scmp.le.s32.totalorder 2, %s24
      // Predicated region
      $region61: #{tpu_custom_call.1} parent=5 // pred_check
        %p2702 = pneg %p2701
      $region62: #{tpu_custom_call.1} parent=5 // pred_check_branch
        %2704 = sbr.rel (%p2702) target = $region64
      $region63: #{tpu_custom_call.1} parent=5 // pred_region
        %s2705 = ssub.s32 %s24, 2
        // Predicated region
        $region65: #{tpu_custom_call.1} parent=63 // pred_check
          %p2706 = pneg %p236
        $region66: #{tpu_custom_call.1} parent=63 // pred_check_branch
          %2708 = sbr.rel (%p2706) target = $region68
        $region67: #{tpu_custom_call.1} parent=63 // pred_region
          %s2709 = sand.u32 %s221, 1
          %s2710 = scalar_lea.sflag [#allocation4], %s2709
          %s2711 = sand.u32 %s221, 1
          %s2712 = smul.addr %s2711, 2
          %s2713 = scalar_lea.vmem [#allocation3], %s2712
          %2714 = dma.done %s2710, 32
        $region68: #{tpu_custom_call.1} parent=63 // pred_fallthru
          _
        // Predicated region
        $region69: #{tpu_custom_call.1} parent=63 // pred_check
          %p2715 = pneg %p262
        $region70: #{tpu_custom_call.1} parent=63 // pred_check_branch
          %2717 = sbr.rel (%p2715) target = $region72
        $region71: #{tpu_custom_call.1} parent=63 // pred_region
          %s2718 = sand.u32 %s247, 1
          %s2719 = scalar_lea.sflag [#allocation6], %s2718
          %s2720 = sand.u32 %s247, 1
          %s2721 = smul.addr %s2720, 2
          %s2722 = scalar_lea.vmem [#allocation5], %s2721
          %2723 = dma.done %s2719, 32
        $region72: #{tpu_custom_call.1} parent=63 // pred_fallthru
          _
      $region64: #{tpu_custom_call.1} parent=5 // pred_fallthru
        _
    $region6: #{tpu_custom_call.1} parent=1 // loop_footer
      %s28 = sadd.s32 1, %s24
    $region7: #{tpu_custom_call.1} parent=1 // loop_footer_branch
      %23 = sbr.rel target = $region3
    $region8: #{tpu_custom_call.1} parent=1 // loop_exit
      _
    %2724 = vsyncpa [#allocation4], 1
    %s2725 = scalar_lea.sflag [#allocation4], 1
    %2726 = vsyncpa %s2725, 1
    %2727 = vsyncpa [#allocation6], 1
    %s2728 = scalar_lea.sflag [#allocation6], 1
    %2729 = vsyncpa %s2728, 1

</llo_original>
